<compile_context>
chip_gen: v6e
topology: v6e:2x2x1
jax: 0.10.0
libtpu: 0.0.40
codegen_flags: <defaults>
</compile_context>

<pallas_src>
import numpy as np
import jax
import jax.numpy as jnp
from jax.experimental import pallas as pl
from jax.experimental.pallas import tpu as pltpu

_NEG = -1e30
_POS = 1e30
_INV_LN2 = 1.4426950408889634  # 1 / ln(2)


# --------------------------------------------------------------------------
# Kernel 1: per-edge precompute.
# Produces a [30, E] matrix of "RHS rows":
#   rows  0..14 : RHS for passes whose destination is dst0  ("in" direction)
#   rows 15..29 : RHS for passes whose destination is src0  ("out" direction)
# Row layout inside each 15-row half:
#   0: ones, 1: v, 2: v^2, 3: entropy contrib            (struct pass 0 / 1)
#   4: v', 5: v'^2, 6: entropy contrib                   (struct pass 2 half)
#   7: w, 8: w^2, 9: contrib(w pass), 10: contrib(w concat-pass half)
#   11: ts, 12: ts^2, 13: contrib(ts pass), 14: contrib(ts concat-pass half)
# --------------------------------------------------------------------------
def _edge_kernel(ei_ref, eit_ref, w_ref, ts_ref, wtc_ref, pre_ref):
    E = ei_ref.shape[1]
    s_row = ei_ref[0:1, :]                # [1,E] int32  src ids
    d_row = ei_ref[1:2, :]                # [1,E] int32  dst ids
    s_col = eit_ref[:, 0:1]               # [E,1] int32
    d_col = eit_ref[:, 1:2]               # [E,1] int32
    w_row = w_ref[0:1, :]                 # [1,E] f32
    ts_row = ts_ref[0:1, :]
    w_col = wtc_ref[:, 0:1]               # [E,1] f32
    ts_col = wtc_ref[:, 1:2]

    ones_row = jnp.ones((1, E), jnp.float32)
    ones_col = jnp.ones((E, 1), jnp.float32)

    # MXU reductions of the pairwise (bool) matrices.
    def colsum(m):                        # [E,E] bool -> [1,E]  (sum over rows e)
        return jnp.dot(ones_row, m.astype(jnp.float32),
                       preferred_element_type=jnp.float32)

    def rowsum(m):                        # [E,E] bool -> [E,1]  (sum over cols f)
        return jnp.dot(m.astype(jnp.float32), ones_col,
                       preferred_element_type=jnp.float32)

    # Pairwise destination-equality matrices M[e, f].
    A = d_col == d_row                    # d_e == d_f
    B = s_col == s_row                    # s_e == s_f
    P = d_col == s_row                    # d_e == s_f
    Q = s_col == d_row                    # s_e == d_f

    # Exact per-edge degree gathers (0/1 matmuls accumulate exactly in f32).
    in_d = colsum(A)                      # in_deg [dst_f]
    in_s = colsum(P)                      # in_deg [src_f]
    out_s = colsum(B)                     # out_deg[src_f]
    out_d = colsum(Q)                     # out_deg[dst_f]
    in_d_c = rowsum(A)                    # same, as [E,1] columns
    in_s_c = rowsum(Q)
    out_s_c = rowsum(B)
    out_d_c = rowsum(P)

    # Per-pass gathered values (row + column forms).
    v0, v0_c = in_s, in_s_c                               # struct p0: in_deg[src],  dst=dst0
    v1, v1_c = out_d, out_d_c                             # struct p1: out_deg[dst], dst=src0
    v2, v2_c = in_d + out_d, in_d_c + out_d_c             # struct p2 half0: tot_deg[dst], dst=src0
    v3, v3_c = in_s + out_s, in_s_c + out_s_c             # struct p2 half1: tot_deg[src], dst=dst0

    # Per-edge group sizes T (#edges sharing this edge's destination) per pass.
    t_in, t_out, t_tot_s, t_tot_d = in_d, out_s, v3, v2   # all >= 1

    def ent_contrib(c, t):                # -(1/T) * log2(c / T)
        return -(1.0 / t) * (jnp.log(c) - jnp.log(t)) * _INV_LN2

    def csum(dmat, vcol, vrow):           # #edges with same destination AND same value
        return colsum(jnp.logical_and(dmat, vcol == vrow))

    # structural entropy counts
    c_s0 = csum(A, v0_c, v0)
    c_s1 = csum(B, v1_c, v1)
    c_s2_h0 = csum(B, v2_c, v2) + csum(P, v3_c, v2)
    c_s2_h1 = csum(Q, v2_c, v3) + csum(A, v3_c, v3)

    # edge-feature entropy counts; the concat pass reuses the pass-0/1 diagonal blocks
    def feat_counts(vcol, vrow):
        cA = csum(A, vcol, vrow)
        cB = csum(B, vcol, vrow)
        cP = csum(P, vcol, vrow)
        cQ = csum(Q, vcol, vrow)
        return cA, cB, cB + cP, cA + cQ   # pass0, pass1, concat-half0, concat-half1

    c_w0, c_w1, c_w2_h0, c_w2_h1 = feat_counts(w_col, w_row)
    c_t0, c_t1, c_t2_h0, c_t2_h1 = feat_counts(ts_col, ts_row)

    rows = [
        # ---- "in" RHS (destination = dst0) ----
        ones_row,
        v0, v0 * v0, ent_contrib(c_s0, t_in),
        v3, v3 * v3, ent_contrib(c_s2_h1, t_tot_d),
        w_row, w_row * w_row, ent_contrib(c_w0, t_in), ent_contrib(c_w2_h1, t_tot_d),
        ts_row, ts_row * ts_row, ent_contrib(c_t0, t_in), ent_contrib(c_t2_h1, t_tot_d),
        # ---- "out" RHS (destination = src0) ----
        ones_row,
        v1, v1 * v1, ent_contrib(c_s1, t_out),
        v2, v2 * v2, ent_contrib(c_s2_h0, t_tot_s),
        w_row, w_row * w_row, ent_contrib(c_w1, t_out), ent_contrib(c_w2_h0, t_tot_s),
        ts_row, ts_row * ts_row, ent_contrib(c_t1, t_out), ent_contrib(c_t2_h0, t_tot_s),
    ]
    for k, r in enumerate(rows):          # 30 lane-dense row stores
        pre_ref[k:k + 1, :] = r


# --------------------------------------------------------------------------
# Kernel 2: node-tiled stats.  Grid over node tiles (parallel).
# --------------------------------------------------------------------------
def _node_kernel(ei_ref, prer_ref, prec_ref, out_ref):
    T = out_ref.shape[0]
    tile = pl.program_id(0)
    node_ids = tile * T + jax.lax.broadcasted_iota(jnp.int32, (T, 1), 0)

    s_row = ei_ref[0:1, :]
    d_row = ei_ref[1:2, :]
    in_b = node_ids == d_row              # [T,E], reused by every pass
    out_b = node_ids == s_row
    in_mask = in_b.astype(jnp.float32)
    out_mask = out_b.astype(jnp.float32)

    # All counts / sums / sum-of-squares / entropies in two MXU matmuls.
    S_in = jnp.dot(in_mask, prec_ref[:, 0:15], preferred_element_type=jnp.float32)
    S_out = jnp.dot(out_mask, prec_ref[:, 15:30], preferred_element_type=jnp.float32)

    cin = lambda k: S_in[:, k:k + 1]
    cout = lambda k: S_out[:, k:k + 1]
    vrow = lambda k: prer_ref[k:k + 1, :]

    def mmax(mb, vr):
        return jnp.max(jnp.where(mb, vr, _NEG), axis=1, keepdims=True)

    def mmin(mb, vr):
        return jnp.min(jnp.where(mb, vr, _POS), axis=1, keepdims=True)

    in_deg = cin(0)
    out_deg = cout(0)
    tot_deg = in_deg + out_deg

    def finalize(count, ssum, ssq, rmax, rmin, rent):
        has = count > 0.0
        mean = ssum / jnp.maximum(count, 1.0)
        var_sum = jnp.maximum(ssq - ssum * mean, 0.0)       # sum (v-mean)^2 via identity
        std = jnp.sqrt(var_sum / jnp.maximum(count - 1.0, 1.0))  # unbiased, torch_scatter style
        return [ssum, mean,
                jnp.where(has, rmax, 0.0), jnp.where(has, rmin, 0.0),
                std, jnp.where(has, rent, 0.0)]

    cols = [in_deg, out_deg, tot_deg]
    v0r, v3r, vwr, vtr = vrow(1), vrow(4), vrow(7), vrow(11)
    v1r, v2r = vrow(16), vrow(19)

    # struct pass 0: dst = dst0, vals = in_deg[src0]
    cols += finalize(in_deg, cin(1), cin(2), mmax(in_b, v0r), mmin(in_b, v0r), cin(3))
    # struct pass 1: dst = src0, vals = out_deg[dst0]
    cols += finalize(out_deg, cout(1), cout(2), mmax(out_b, v1r), mmin(out_b, v1r), cout(3))
    # struct pass 2 (concat) = half0 (dst=src0, tot_deg[dst0]) + half1 (dst=dst0, tot_deg[src0])
    cols += finalize(tot_deg, cout(4) + cin(4), cout(5) + cin(5),
                     jnp.maximum(mmax(out_b, v2r), mmax(in_b, v3r)),
                     jnp.minimum(mmin(out_b, v2r), mmin(in_b, v3r)),
                     cout(6) + cin(6))

    # edge-feature passes: weights (base 7) then ts (base 11)
    for base, vr in ((7, vwr), (11, vtr)):
        cols += finalize(in_deg, cin(base), cin(base + 1),
                         mmax(in_b, vr), mmin(in_b, vr), cin(base + 2))
        cols += finalize(out_deg, cout(base), cout(base + 1),
                         mmax(out_b, vr), mmin(out_b, vr), cout(base + 2))
        cols += finalize(tot_deg, cin(base) + cout(base), cin(base + 1) + cout(base + 1),
                         jnp.maximum(mmax(in_b, vr), mmax(out_b, vr)),
                         jnp.minimum(mmin(in_b, vr), mmin(out_b, vr)),
                         cin(base + 3) + cout(base + 3))

    cols.append(jnp.zeros((T, 64 - len(cols)), jnp.float32))   # pad 57 -> 64 lanes
    out_ref[...] = jnp.concatenate(cols, axis=1)               # single lane-dense store


# --------------------------------------------------------------------------
# Wrapper
# --------------------------------------------------------------------------
def tgbase_forward(ei, weights, ts, num_nodes, tile_n=128):
    """TGBase forward pass.  Returns [num_nodes, 57] float32."""
    E = ei.shape[1]
    ei = ei.astype(jnp.int32)
    w_row = jnp.asarray(weights, jnp.float32).reshape(1, E)
    ts_row = jnp.asarray(ts, jnp.float32).reshape(1, E)
    ei_t = ei.T                                             # [E,2] (src, dst) columns
    wt_col = jnp.concatenate([w_row, ts_row], axis=0).T     # [E,2]

    vmem_params = pltpu.CompilerParams(vmem_limit_bytes=64 * 1024 * 1024)

    # Phase 1: per-edge RHS rows [30, E]
    pre = pl.pallas_call(
        _edge_kernel,
        out_shape=jax.ShapeDtypeStruct((30, E), jnp.float32),
        in_specs=[pl.BlockSpec(memory_space=pltpu.MemorySpace.VMEM) for _ in range(5)],
        out_specs=pl.BlockSpec(memory_space=pltpu.MemorySpace.VMEM),
        compiler_params=vmem_params,
    )(ei, ei_t, w_row, ts_row, wt_col)

    pre_t = pre.T                                           # [E,30] layout plumbing in XLA

    # Phase 2: node-tiled stats, grid over node tiles (parallel).
    n_tiles = pl.cdiv(num_nodes, tile_n)
    n_pad = n_tiles * tile_n
    out = pl.pallas_call(
        _node_kernel,
        out_shape=jax.ShapeDtypeStruct((n_pad, 64), jnp.float32),
        grid=(n_tiles,),
        in_specs=[
            pl.BlockSpec((2, E), lambda i: (0, 0)),
            pl.BlockSpec((30, E), lambda i: (0, 0)),
            pl.BlockSpec((E, 30), lambda i: (0, 0)),
        ],
        out_specs=pl.BlockSpec((tile_n, 64), lambda i: (i, 0)),
        compiler_params=pltpu.CompilerParams(
            dimension_semantics=("parallel",),
            vmem_limit_bytes=64 * 1024 * 1024),
    )(ei, pre, pre_t)
    return out[:num_nodes, :57]


# ---------------- pure numpy reference (mirrors PyTorch semantics) ----------------
def _ref_stats(dst, vals, N):
    groups = [[] for _ in range(N)]
    for e in range(len(dst)):
        groups[int(dst[e])].append(float(vals[e]))
    add, mean, mx, mn, std, ent = [], [], [], [], [], []
    for g in groups:
        if not g:
            add.append(0.0); mean.append(0.0); mx.append(0.0); mn.append(0.0)
            std.append(0.0); ent.append(0.0)
            continue
        a = np.array(g, dtype=np.float64)
        add.append(a.sum()); mean.append(a.mean()); mx.append(a.max()); mn.append(a.min())
        std.append(np.sqrt(np.sum((a - a.mean()) ** 2) / max(len(a) - 1, 1)))
        _, counts = np.unique(a, return_counts=True)
        p = counts / counts.sum()
        ent.append(float(-(p * np.log2(p)).sum()))
    return [np.array(c) for c in (add, mean, mx, mn, std, ent)]


def tgbase_reference(ei, weights, ts, N):
    src0, dst0 = ei[0], ei[1]
    in_deg = np.array([np.sum(dst0 == n) for n in range(N)], dtype=np.float64)
    out_deg = np.array([np.sum(src0 == n) for n in range(N)], dtype=np.float64)
    tot_deg = in_deg + out_deg
    cols = [in_deg, out_deg, tot_deg]
    struct_passes = [
        (src0, dst0, in_deg),
        (dst0, src0, out_deg),
        (np.concatenate([dst0, src0]), np.concatenate([src0, dst0]), tot_deg),
    ]
    for s, d, deg in struct_passes:
        cols += _ref_stats(d, deg[s], N)
    for v in (np.asarray(weights, np.float64), np.asarray(ts, np.float64)):
        edge_passes = [
            (dst0, v),
            (src0, v),
            (np.concatenate([src0, dst0]), np.concatenate([v, v])),
        ]
        for d, vals in edge_passes:
            cols += _ref_stats(d, vals, N)
    return np.stack(cols, axis=1)


if __name__ == "__main__":
    key = jax.random.PRNGKey(0)

    # Test 1: original toy sizes (single node tile).
    N, E = 8, 16
    k1, k2, k3 = jax.random.split(key, 3)
    src = jax.random.randint(k1, (E,), 0, N)
    dst = jax.random.randint(k2, (E,), 0, N)
    ei = jnp.stack([src, dst]).astype(jnp.int32)                 # [2, E]
    weights = jax.random.uniform(k3, (E,), dtype=jnp.float32)    # [E]
    ts = jnp.floor(jnp.arange(E, dtype=jnp.float32) / 3.0)       # [E] with duplicates

    out = jax.block_until_ready(tgbase_forward(ei, weights, ts, N))
    ref = tgbase_reference(np.array(ei), np.array(weights), np.array(ts), N)
    assert out.shape == (N, 57), out.shape
    np.testing.assert_allclose(np.array(out), ref, rtol=5e-4, atol=5e-4)

    # Test 2: exercises the multi-tile parallel node grid (3 tiles of 8 nodes).
    N2, E2 = 20, 64
    k4, k5, k6 = jax.random.split(k3, 3)
    src2 = jax.random.randint(k4, (E2,), 0, N2)
    dst2 = jax.random.randint(k5, (E2,), 0, N2)
    ei2 = jnp.stack([src2, dst2]).astype(jnp.int32)
    w2 = jax.random.uniform(k6, (E2,), dtype=jnp.float32)
    ts2 = jnp.floor(jnp.arange(E2, dtype=jnp.float32) / 4.0)

    out2 = jax.block_until_ready(tgbase_forward(ei2, w2, ts2, N2, tile_n=8))
    ref2 = tgbase_reference(np.array(ei2), np.array(w2), np.array(ts2), N2)
    assert out2.shape == (N2, 57), out2.shape
    np.testing.assert_allclose(np.array(out2), ref2, rtol=5e-4, atol=5e-4)

    print("KERNEL_OK")
</pallas_src>

<mosaic_0001>
module attributes {stable_mosaic.version = 11 : i64} {
  func.func @_edge_kernel(%arg0: memref<2x16xi32, #tpu.memory_space<vmem>>, %arg1: memref<16x2xi32, #tpu.memory_space<vmem>>, %arg2: memref<1x16xf32, #tpu.memory_space<vmem>>, %arg3: memref<1x16xf32, #tpu.memory_space<vmem>>, %arg4: memref<16x2xf32, #tpu.memory_space<vmem>>, %arg5: memref<30x16xf32, #tpu.memory_space<vmem>>) attributes {dimension_semantics = [], scalar_prefetch = 0 : i64, scratch_operands = 0 : i64, tpu.core_type = #tpu.core_type<tc>} {
    %c0 = arith.constant 0 : index
    %c0_0 = arith.constant 0 : index
    %0 = vector.load %arg0[%c0, %c0_0] : memref<2x16xi32, #tpu.memory_space<vmem>>, vector<1x16xi32>
    %c1 = arith.constant 1 : index
    %c0_1 = arith.constant 0 : index
    %1 = vector.load %arg0[%c1, %c0_1] : memref<2x16xi32, #tpu.memory_space<vmem>>, vector<1x16xi32>
    %c0_2 = arith.constant 0 : index
    %c0_3 = arith.constant 0 : index
    %2 = vector.load %arg1[%c0_2, %c0_3] : memref<16x2xi32, #tpu.memory_space<vmem>>, vector<16x1xi32>
    %c0_4 = arith.constant 0 : index
    %c1_5 = arith.constant 1 : index
    %3 = vector.load %arg1[%c0_4, %c1_5] : memref<16x2xi32, #tpu.memory_space<vmem>>, vector<16x1xi32>
    %c0_6 = arith.constant 0 : index
    %c0_7 = arith.constant 0 : index
    %4 = vector.load %arg2[%c0_6, %c0_7] : memref<1x16xf32, #tpu.memory_space<vmem>>, vector<1x16xf32>
    %c0_8 = arith.constant 0 : index
    %c0_9 = arith.constant 0 : index
    %5 = vector.load %arg3[%c0_8, %c0_9] : memref<1x16xf32, #tpu.memory_space<vmem>>, vector<1x16xf32>
    %c0_10 = arith.constant 0 : index
    %c0_11 = arith.constant 0 : index
    %6 = vector.load %arg4[%c0_10, %c0_11] : memref<16x2xf32, #tpu.memory_space<vmem>>, vector<16x1xf32>
    %c0_12 = arith.constant 0 : index
    %c1_13 = arith.constant 1 : index
    %7 = vector.load %arg4[%c0_12, %c1_13] : memref<16x2xf32, #tpu.memory_space<vmem>>, vector<16x1xf32>
    %cst = arith.constant 1.000000e+00 : f32
    %8 = vector.broadcast %cst : f32 to vector<1x16xf32>
    %cst_14 = arith.constant 1.000000e+00 : f32
    %9 = vector.broadcast %cst_14 : f32 to vector<16x1xf32>
    %10 = vector.broadcast %3 : vector<16x1xi32> to vector<16x16xi32>
    %11 = vector.broadcast %1 : vector<1x16xi32> to vector<16x16xi32>
    %12 = arith.cmpi eq, %10, %11 : vector<16x16xi32>
    %13 = vector.broadcast %2 : vector<16x1xi32> to vector<16x16xi32>
    %14 = vector.broadcast %0 : vector<1x16xi32> to vector<16x16xi32>
    %15 = arith.cmpi eq, %13, %14 : vector<16x16xi32>
    %16 = vector.broadcast %3 : vector<16x1xi32> to vector<16x16xi32>
    %17 = vector.broadcast %0 : vector<1x16xi32> to vector<16x16xi32>
    %18 = arith.cmpi eq, %16, %17 : vector<16x16xi32>
    %19 = vector.broadcast %2 : vector<16x1xi32> to vector<16x16xi32>
    %20 = vector.broadcast %1 : vector<1x16xi32> to vector<16x16xi32>
    %21 = arith.cmpi eq, %19, %20 : vector<16x16xi32>
    %22 = arith.extui %12 : vector<16x16xi1> to vector<16x16xi32>
    %23 = arith.sitofp %22 : vector<16x16xi32> to vector<16x16xf32>
    %cst_15 = arith.constant dense<0.000000e+00> : vector<1x16xf32>
    %24 = tpu.matmul %8, %23, %cst_15 {dimension_numbers = #tpu.dot_dimension_numbers<[1], [0], [0], [1], [0, 0, 1, 1], [], []>} : vector<1x16xf32>, vector<16x16xf32>, vector<1x16xf32> -> vector<1x16xf32>
    %25 = arith.extui %18 : vector<16x16xi1> to vector<16x16xi32>
    %26 = arith.sitofp %25 : vector<16x16xi32> to vector<16x16xf32>
    %cst_16 = arith.constant dense<0.000000e+00> : vector<1x16xf32>
    %27 = tpu.matmul %8, %26, %cst_16 {dimension_numbers = #tpu.dot_dimension_numbers<[1], [0], [0], [1], [0, 0, 1, 1], [], []>} : vector<1x16xf32>, vector<16x16xf32>, vector<1x16xf32> -> vector<1x16xf32>
    %28 = arith.extui %15 : vector<16x16xi1> to vector<16x16xi32>
    %29 = arith.sitofp %28 : vector<16x16xi32> to vector<16x16xf32>
    %cst_17 = arith.constant dense<0.000000e+00> : vector<1x16xf32>
    %30 = tpu.matmul %8, %29, %cst_17 {dimension_numbers = #tpu.dot_dimension_numbers<[1], [0], [0], [1], [0, 0, 1, 1], [], []>} : vector<1x16xf32>, vector<16x16xf32>, vector<1x16xf32> -> vector<1x16xf32>
    %31 = arith.extui %21 : vector<16x16xi1> to vector<16x16xi32>
    %32 = arith.sitofp %31 : vector<16x16xi32> to vector<16x16xf32>
    %cst_18 = arith.constant dense<0.000000e+00> : vector<1x16xf32>
    %33 = tpu.matmul %8, %32, %cst_18 {dimension_numbers = #tpu.dot_dimension_numbers<[1], [0], [0], [1], [0, 0, 1, 1], [], []>} : vector<1x16xf32>, vector<16x16xf32>, vector<1x16xf32> -> vector<1x16xf32>
    %34 = arith.extui %12 : vector<16x16xi1> to vector<16x16xi32>
    %35 = arith.sitofp %34 : vector<16x16xi32> to vector<16x16xf32>
    %cst_19 = arith.constant dense<0.000000e+00> : vector<16x1xf32>
    %36 = tpu.matmul %35, %9, %cst_19 {dimension_numbers = #tpu.dot_dimension_numbers<[1], [0], [0], [1], [0, 0, 1, 1], [], []>} : vector<16x16xf32>, vector<16x1xf32>, vector<16x1xf32> -> vector<16x1xf32>
    %37 = arith.extui %21 : vector<16x16xi1> to vector<16x16xi32>
    %38 = arith.sitofp %37 : vector<16x16xi32> to vector<16x16xf32>
    %cst_20 = arith.constant dense<0.000000e+00> : vector<16x1xf32>
    %39 = tpu.matmul %38, %9, %cst_20 {dimension_numbers = #tpu.dot_dimension_numbers<[1], [0], [0], [1], [0, 0, 1, 1], [], []>} : vector<16x16xf32>, vector<16x1xf32>, vector<16x1xf32> -> vector<16x1xf32>
    %40 = arith.extui %15 : vector<16x16xi1> to vector<16x16xi32>
    %41 = arith.sitofp %40 : vector<16x16xi32> to vector<16x16xf32>
    %cst_21 = arith.constant dense<0.000000e+00> : vector<16x1xf32>
    %42 = tpu.matmul %41, %9, %cst_21 {dimension_numbers = #tpu.dot_dimension_numbers<[1], [0], [0], [1], [0, 0, 1, 1], [], []>} : vector<16x16xf32>, vector<16x1xf32>, vector<16x1xf32> -> vector<16x1xf32>
    %43 = arith.extui %18 : vector<16x16xi1> to vector<16x16xi32>
    %44 = arith.sitofp %43 : vector<16x16xi32> to vector<16x16xf32>
    %cst_22 = arith.constant dense<0.000000e+00> : vector<16x1xf32>
    %45 = tpu.matmul %44, %9, %cst_22 {dimension_numbers = #tpu.dot_dimension_numbers<[1], [0], [0], [1], [0, 0, 1, 1], [], []>} : vector<16x16xf32>, vector<16x1xf32>, vector<16x1xf32> -> vector<16x1xf32>
    %46 = arith.addf %24, %33 : vector<1x16xf32>
    %47 = arith.addf %36, %45 : vector<16x1xf32>
    %48 = arith.addf %27, %30 : vector<1x16xf32>
    %49 = arith.addf %39, %42 : vector<16x1xf32>
    %50 = vector.broadcast %39 : vector<16x1xf32> to vector<16x16xf32>
    %51 = vector.broadcast %27 : vector<1x16xf32> to vector<16x16xf32>
    %52 = arith.cmpf oeq, %50, %51 : vector<16x16xf32>
    %53 = arith.andi %12, %52 : vector<16x16xi1>
    %54 = arith.extui %53 : vector<16x16xi1> to vector<16x16xi32>
    %55 = arith.sitofp %54 : vector<16x16xi32> to vector<16x16xf32>
    %cst_23 = arith.constant dense<0.000000e+00> : vector<1x16xf32>
    %56 = tpu.matmul %8, %55, %cst_23 {dimension_numbers = #tpu.dot_dimension_numbers<[1], [0], [0], [1], [0, 0, 1, 1], [], []>} : vector<1x16xf32>, vector<16x16xf32>, vector<1x16xf32> -> vector<1x16xf32>
    %57 = vector.broadcast %45 : vector<16x1xf32> to vector<16x16xf32>
    %58 = vector.broadcast %33 : vector<1x16xf32> to vector<16x16xf32>
    %59 = arith.cmpf oeq, %57, %58 : vector<16x16xf32>
    %60 = arith.andi %15, %59 : vector<16x16xi1>
    %61 = arith.extui %60 : vector<16x16xi1> to vector<16x16xi32>
    %62 = arith.sitofp %61 : vector<16x16xi32> to vector<16x16xf32>
    %cst_24 = arith.constant dense<0.000000e+00> : vector<1x16xf32>
    %63 = tpu.matmul %8, %62, %cst_24 {dimension_numbers = #tpu.dot_dimension_numbers<[1], [0], [0], [1], [0, 0, 1, 1], [], []>} : vector<1x16xf32>, vector<16x16xf32>, vector<1x16xf32> -> vector<1x16xf32>
    %64 = vector.broadcast %47 : vector<16x1xf32> to vector<16x16xf32>
    %65 = vector.broadcast %46 : vector<1x16xf32> to vector<16x16xf32>
    %66 = arith.cmpf oeq, %64, %65 : vector<16x16xf32>
    %67 = arith.andi %15, %66 : vector<16x16xi1>
    %68 = arith.extui %67 : vector<16x16xi1> to vector<16x16xi32>
    %69 = arith.sitofp %68 : vector<16x16xi32> to vector<16x16xf32>
    %cst_25 = arith.constant dense<0.000000e+00> : vector<1x16xf32>
    %70 = tpu.matmul %8, %69, %cst_25 {dimension_numbers = #tpu.dot_dimension_numbers<[1], [0], [0], [1], [0, 0, 1, 1], [], []>} : vector<1x16xf32>, vector<16x16xf32>, vector<1x16xf32> -> vector<1x16xf32>
    %71 = vector.broadcast %49 : vector<16x1xf32> to vector<16x16xf32>
    %72 = vector.broadcast %46 : vector<1x16xf32> to vector<16x16xf32>
    %73 = arith.cmpf oeq, %71, %72 : vector<16x16xf32>
    %74 = arith.andi %18, %73 : vector<16x16xi1>
    %75 = arith.extui %74 : vector<16x16xi1> to vector<16x16xi32>
    %76 = arith.sitofp %75 : vector<16x16xi32> to vector<16x16xf32>
    %cst_26 = arith.constant dense<0.000000e+00> : vector<1x16xf32>
    %77 = tpu.matmul %8, %76, %cst_26 {dimension_numbers = #tpu.dot_dimension_numbers<[1], [0], [0], [1], [0, 0, 1, 1], [], []>} : vector<1x16xf32>, vector<16x16xf32>, vector<1x16xf32> -> vector<1x16xf32>
    %78 = arith.addf %70, %77 : vector<1x16xf32>
    %79 = vector.broadcast %47 : vector<16x1xf32> to vector<16x16xf32>
    %80 = vector.broadcast %48 : vector<1x16xf32> to vector<16x16xf32>
    %81 = arith.cmpf oeq, %79, %80 : vector<16x16xf32>
    %82 = arith.andi %21, %81 : vector<16x16xi1>
    %83 = arith.extui %82 : vector<16x16xi1> to vector<16x16xi32>
    %84 = arith.sitofp %83 : vector<16x16xi32> to vector<16x16xf32>
    %cst_27 = arith.constant dense<0.000000e+00> : vector<1x16xf32>
    %85 = tpu.matmul %8, %84, %cst_27 {dimension_numbers = #tpu.dot_dimension_numbers<[1], [0], [0], [1], [0, 0, 1, 1], [], []>} : vector<1x16xf32>, vector<16x16xf32>, vector<1x16xf32> -> vector<1x16xf32>
    %86 = vector.broadcast %49 : vector<16x1xf32> to vector<16x16xf32>
    %87 = vector.broadcast %48 : vector<1x16xf32> to vector<16x16xf32>
    %88 = arith.cmpf oeq, %86, %87 : vector<16x16xf32>
    %89 = arith.andi %12, %88 : vector<16x16xi1>
    %90 = arith.extui %89 : vector<16x16xi1> to vector<16x16xi32>
    %91 = arith.sitofp %90 : vector<16x16xi32> to vector<16x16xf32>
    %cst_28 = arith.constant dense<0.000000e+00> : vector<1x16xf32>
    %92 = tpu.matmul %8, %91, %cst_28 {dimension_numbers = #tpu.dot_dimension_numbers<[1], [0], [0], [1], [0, 0, 1, 1], [], []>} : vector<1x16xf32>, vector<16x16xf32>, vector<1x16xf32> -> vector<1x16xf32>
    %93 = arith.addf %85, %92 : vector<1x16xf32>
    %94 = vector.broadcast %6 : vector<16x1xf32> to vector<16x16xf32>
    %95 = vector.broadcast %4 : vector<1x16xf32> to vector<16x16xf32>
    %96 = arith.cmpf oeq, %94, %95 : vector<16x16xf32>
    %97 = arith.andi %12, %96 : vector<16x16xi1>
    %98 = arith.extui %97 : vector<16x16xi1> to vector<16x16xi32>
    %99 = arith.sitofp %98 : vector<16x16xi32> to vector<16x16xf32>
    %cst_29 = arith.constant dense<0.000000e+00> : vector<1x16xf32>
    %100 = tpu.matmul %8, %99, %cst_29 {dimension_numbers = #tpu.dot_dimension_numbers<[1], [0], [0], [1], [0, 0, 1, 1], [], []>} : vector<1x16xf32>, vector<16x16xf32>, vector<1x16xf32> -> vector<1x16xf32>
    %101 = vector.broadcast %6 : vector<16x1xf32> to vector<16x16xf32>
    %102 = vector.broadcast %4 : vector<1x16xf32> to vector<16x16xf32>
    %103 = arith.cmpf oeq, %101, %102 : vector<16x16xf32>
    %104 = arith.andi %15, %103 : vector<16x16xi1>
    %105 = arith.extui %104 : vector<16x16xi1> to vector<16x16xi32>
    %106 = arith.sitofp %105 : vector<16x16xi32> to vector<16x16xf32>
    %cst_30 = arith.constant dense<0.000000e+00> : vector<1x16xf32>
    %107 = tpu.matmul %8, %106, %cst_30 {dimension_numbers = #tpu.dot_dimension_numbers<[1], [0], [0], [1], [0, 0, 1, 1], [], []>} : vector<1x16xf32>, vector<16x16xf32>, vector<1x16xf32> -> vector<1x16xf32>
    %108 = vector.broadcast %6 : vector<16x1xf32> to vector<16x16xf32>
    %109 = vector.broadcast %4 : vector<1x16xf32> to vector<16x16xf32>
    %110 = arith.cmpf oeq, %108, %109 : vector<16x16xf32>
    %111 = arith.andi %18, %110 : vector<16x16xi1>
    %112 = arith.extui %111 : vector<16x16xi1> to vector<16x16xi32>
    %113 = arith.sitofp %112 : vector<16x16xi32> to vector<16x16xf32>
    %cst_31 = arith.constant dense<0.000000e+00> : vector<1x16xf32>
    %114 = tpu.matmul %8, %113, %cst_31 {dimension_numbers = #tpu.dot_dimension_numbers<[1], [0], [0], [1], [0, 0, 1, 1], [], []>} : vector<1x16xf32>, vector<16x16xf32>, vector<1x16xf32> -> vector<1x16xf32>
    %115 = vector.broadcast %6 : vector<16x1xf32> to vector<16x16xf32>
    %116 = vector.broadcast %4 : vector<1x16xf32> to vector<16x16xf32>
    %117 = arith.cmpf oeq, %115, %116 : vector<16x16xf32>
    %118 = arith.andi %21, %117 : vector<16x16xi1>
    %119 = arith.extui %118 : vector<16x16xi1> to vector<16x16xi32>
    %120 = arith.sitofp %119 : vector<16x16xi32> to vector<16x16xf32>
    %cst_32 = arith.constant dense<0.000000e+00> : vector<1x16xf32>
    %121 = tpu.matmul %8, %120, %cst_32 {dimension_numbers = #tpu.dot_dimension_numbers<[1], [0], [0], [1], [0, 0, 1, 1], [], []>} : vector<1x16xf32>, vector<16x16xf32>, vector<1x16xf32> -> vector<1x16xf32>
    %122 = arith.addf %107, %114 : vector<1x16xf32>
    %123 = arith.addf %100, %121 : vector<1x16xf32>
    %124 = vector.broadcast %7 : vector<16x1xf32> to vector<16x16xf32>
    %125 = vector.broadcast %5 : vector<1x16xf32> to vector<16x16xf32>
    %126 = arith.cmpf oeq, %124, %125 : vector<16x16xf32>
    %127 = arith.andi %12, %126 : vector<16x16xi1>
    %128 = arith.extui %127 : vector<16x16xi1> to vector<16x16xi32>
    %129 = arith.sitofp %128 : vector<16x16xi32> to vector<16x16xf32>
    %cst_33 = arith.constant dense<0.000000e+00> : vector<1x16xf32>
    %130 = tpu.matmul %8, %129, %cst_33 {dimension_numbers = #tpu.dot_dimension_numbers<[1], [0], [0], [1], [0, 0, 1, 1], [], []>} : vector<1x16xf32>, vector<16x16xf32>, vector<1x16xf32> -> vector<1x16xf32>
    %131 = vector.broadcast %7 : vector<16x1xf32> to vector<16x16xf32>
    %132 = vector.broadcast %5 : vector<1x16xf32> to vector<16x16xf32>
    %133 = arith.cmpf oeq, %131, %132 : vector<16x16xf32>
    %134 = arith.andi %15, %133 : vector<16x16xi1>
    %135 = arith.extui %134 : vector<16x16xi1> to vector<16x16xi32>
    %136 = arith.sitofp %135 : vector<16x16xi32> to vector<16x16xf32>
    %cst_34 = arith.constant dense<0.000000e+00> : vector<1x16xf32>
    %137 = tpu.matmul %8, %136, %cst_34 {dimension_numbers = #tpu.dot_dimension_numbers<[1], [0], [0], [1], [0, 0, 1, 1], [], []>} : vector<1x16xf32>, vector<16x16xf32>, vector<1x16xf32> -> vector<1x16xf32>
    %138 = vector.broadcast %7 : vector<16x1xf32> to vector<16x16xf32>
    %139 = vector.broadcast %5 : vector<1x16xf32> to vector<16x16xf32>
    %140 = arith.cmpf oeq, %138, %139 : vector<16x16xf32>
    %141 = arith.andi %18, %140 : vector<16x16xi1>
    %142 = arith.extui %141 : vector<16x16xi1> to vector<16x16xi32>
    %143 = arith.sitofp %142 : vector<16x16xi32> to vector<16x16xf32>
    %cst_35 = arith.constant dense<0.000000e+00> : vector<1x16xf32>
    %144 = tpu.matmul %8, %143, %cst_35 {dimension_numbers = #tpu.dot_dimension_numbers<[1], [0], [0], [1], [0, 0, 1, 1], [], []>} : vector<1x16xf32>, vector<16x16xf32>, vector<1x16xf32> -> vector<1x16xf32>
    %145 = vector.broadcast %7 : vector<16x1xf32> to vector<16x16xf32>
    %146 = vector.broadcast %5 : vector<1x16xf32> to vector<16x16xf32>
    %147 = arith.cmpf oeq, %145, %146 : vector<16x16xf32>
    %148 = arith.andi %21, %147 : vector<16x16xi1>
    %149 = arith.extui %148 : vector<16x16xi1> to vector<16x16xi32>
    %150 = arith.sitofp %149 : vector<16x16xi32> to vector<16x16xf32>
    %cst_36 = arith.constant dense<0.000000e+00> : vector<1x16xf32>
    %151 = tpu.matmul %8, %150, %cst_36 {dimension_numbers = #tpu.dot_dimension_numbers<[1], [0], [0], [1], [0, 0, 1, 1], [], []>} : vector<1x16xf32>, vector<16x16xf32>, vector<1x16xf32> -> vector<1x16xf32>
    %152 = arith.addf %137, %144 : vector<1x16xf32>
    %153 = arith.addf %130, %151 : vector<1x16xf32>
    %154 = arith.mulf %27, %27 : vector<1x16xf32>
    %cst_37 = arith.constant 1.000000e+00 : f32
    %155 = vector.broadcast %cst_37 : f32 to vector<1x16xf32>
    %156 = arith.divf %155, %24 : vector<1x16xf32>
    %cst_38 = arith.constant 0.000000e+00 : f32
    %157 = vector.broadcast %cst_38 : f32 to vector<1x16xf32>
    %158 = arith.subf %157, %156 : vector<1x16xf32>
    %159 = math.log %56 : vector<1x16xf32>
    %160 = math.log %24 : vector<1x16xf32>
    %161 = arith.subf %159, %160 : vector<1x16xf32>
    %162 = arith.mulf %158, %161 : vector<1x16xf32>
    %cst_39 = arith.constant 1.44269502 : f32
    %163 = vector.broadcast %cst_39 : f32 to vector<1x16xf32>
    %164 = arith.mulf %162, %163 : vector<1x16xf32>
    %165 = arith.mulf %48, %48 : vector<1x16xf32>
    %cst_40 = arith.constant 1.000000e+00 : f32
    %166 = vector.broadcast %cst_40 : f32 to vector<1x16xf32>
    %167 = arith.divf %166, %46 : vector<1x16xf32>
    %cst_41 = arith.constant 0.000000e+00 : f32
    %168 = vector.broadcast %cst_41 : f32 to vector<1x16xf32>
    %169 = arith.subf %168, %167 : vector<1x16xf32>
    %170 = math.log %93 : vector<1x16xf32>
    %171 = math.log %46 : vector<1x16xf32>
    %172 = arith.subf %170, %171 : vector<1x16xf32>
    %173 = arith.mulf %169, %172 : vector<1x16xf32>
    %cst_42 = arith.constant 1.44269502 : f32
    %174 = vector.broadcast %cst_42 : f32 to vector<1x16xf32>
    %175 = arith.mulf %173, %174 : vector<1x16xf32>
    %176 = arith.mulf %4, %4 : vector<1x16xf32>
    %cst_43 = arith.constant 1.000000e+00 : f32
    %177 = vector.broadcast %cst_43 : f32 to vector<1x16xf32>
    %178 = arith.divf %177, %24 : vector<1x16xf32>
    %cst_44 = arith.constant 0.000000e+00 : f32
    %179 = vector.broadcast %cst_44 : f32 to vector<1x16xf32>
    %180 = arith.subf %179, %178 : vector<1x16xf32>
    %181 = math.log %100 : vector<1x16xf32>
    %182 = math.log %24 : vector<1x16xf32>
    %183 = arith.subf %181, %182 : vector<1x16xf32>
    %184 = arith.mulf %180, %183 : vector<1x16xf32>
    %cst_45 = arith.constant 1.44269502 : f32
    %185 = vector.broadcast %cst_45 : f32 to vector<1x16xf32>
    %186 = arith.mulf %184, %185 : vector<1x16xf32>
    %cst_46 = arith.constant 1.000000e+00 : f32
    %187 = vector.broadcast %cst_46 : f32 to vector<1x16xf32>
    %188 = arith.divf %187, %46 : vector<1x16xf32>
    %cst_47 = arith.constant 0.000000e+00 : f32
    %189 = vector.broadcast %cst_47 : f32 to vector<1x16xf32>
    %190 = arith.subf %189, %188 : vector<1x16xf32>
    %191 = math.log %123 : vector<1x16xf32>
    %192 = math.log %46 : vector<1x16xf32>
    %193 = arith.subf %191, %192 : vector<1x16xf32>
    %194 = arith.mulf %190, %193 : vector<1x16xf32>
    %cst_48 = arith.constant 1.44269502 : f32
    %195 = vector.broadcast %cst_48 : f32 to vector<1x16xf32>
    %196 = arith.mulf %194, %195 : vector<1x16xf32>
    %197 = arith.mulf %5, %5 : vector<1x16xf32>
    %cst_49 = arith.constant 1.000000e+00 : f32
    %198 = vector.broadcast %cst_49 : f32 to vector<1x16xf32>
    %199 = arith.divf %198, %24 : vector<1x16xf32>
    %cst_50 = arith.constant 0.000000e+00 : f32
    %200 = vector.broadcast %cst_50 : f32 to vector<1x16xf32>
    %201 = arith.subf %200, %199 : vector<1x16xf32>
    %202 = math.log %130 : vector<1x16xf32>
    %203 = math.log %24 : vector<1x16xf32>
    %204 = arith.subf %202, %203 : vector<1x16xf32>
    %205 = arith.mulf %201, %204 : vector<1x16xf32>
    %cst_51 = arith.constant 1.44269502 : f32
    %206 = vector.broadcast %cst_51 : f32 to vector<1x16xf32>
    %207 = arith.mulf %205, %206 : vector<1x16xf32>
    %cst_52 = arith.constant 1.000000e+00 : f32
    %208 = vector.broadcast %cst_52 : f32 to vector<1x16xf32>
    %209 = arith.divf %208, %46 : vector<1x16xf32>
    %cst_53 = arith.constant 0.000000e+00 : f32
    %210 = vector.broadcast %cst_53 : f32 to vector<1x16xf32>
    %211 = arith.subf %210, %209 : vector<1x16xf32>
    %212 = math.log %153 : vector<1x16xf32>
    %213 = math.log %46 : vector<1x16xf32>
    %214 = arith.subf %212, %213 : vector<1x16xf32>
    %215 = arith.mulf %211, %214 : vector<1x16xf32>
    %cst_54 = arith.constant 1.44269502 : f32
    %216 = vector.broadcast %cst_54 : f32 to vector<1x16xf32>
    %217 = arith.mulf %215, %216 : vector<1x16xf32>
    %218 = arith.mulf %33, %33 : vector<1x16xf32>
    %cst_55 = arith.constant 1.000000e+00 : f32
    %219 = vector.broadcast %cst_55 : f32 to vector<1x16xf32>
    %220 = arith.divf %219, %30 : vector<1x16xf32>
    %cst_56 = arith.constant 0.000000e+00 : f32
    %221 = vector.broadcast %cst_56 : f32 to vector<1x16xf32>
    %222 = arith.subf %221, %220 : vector<1x16xf32>
    %223 = math.log %63 : vector<1x16xf32>
    %224 = math.log %30 : vector<1x16xf32>
    %225 = arith.subf %223, %224 : vector<1x16xf32>
    %226 = arith.mulf %222, %225 : vector<1x16xf32>
    %cst_57 = arith.constant 1.44269502 : f32
    %227 = vector.broadcast %cst_57 : f32 to vector<1x16xf32>
    %228 = arith.mulf %226, %227 : vector<1x16xf32>
    %229 = arith.mulf %46, %46 : vector<1x16xf32>
    %cst_58 = arith.constant 1.000000e+00 : f32
    %230 = vector.broadcast %cst_58 : f32 to vector<1x16xf32>
    %231 = arith.divf %230, %48 : vector<1x16xf32>
    %cst_59 = arith.constant 0.000000e+00 : f32
    %232 = vector.broadcast %cst_59 : f32 to vector<1x16xf32>
    %233 = arith.subf %232, %231 : vector<1x16xf32>
    %234 = math.log %78 : vector<1x16xf32>
    %235 = math.log %48 : vector<1x16xf32>
    %236 = arith.subf %234, %235 : vector<1x16xf32>
    %237 = arith.mulf %233, %236 : vector<1x16xf32>
    %cst_60 = arith.constant 1.44269502 : f32
    %238 = vector.broadcast %cst_60 : f32 to vector<1x16xf32>
    %239 = arith.mulf %237, %238 : vector<1x16xf32>
    %240 = arith.mulf %4, %4 : vector<1x16xf32>
    %cst_61 = arith.constant 1.000000e+00 : f32
    %241 = vector.broadcast %cst_61 : f32 to vector<1x16xf32>
    %242 = arith.divf %241, %30 : vector<1x16xf32>
    %cst_62 = arith.constant 0.000000e+00 : f32
    %243 = vector.broadcast %cst_62 : f32 to vector<1x16xf32>
    %244 = arith.subf %243, %242 : vector<1x16xf32>
    %245 = math.log %107 : vector<1x16xf32>
    %246 = math.log %30 : vector<1x16xf32>
    %247 = arith.subf %245, %246 : vector<1x16xf32>
    %248 = arith.mulf %244, %247 : vector<1x16xf32>
    %cst_63 = arith.constant 1.44269502 : f32
    %249 = vector.broadcast %cst_63 : f32 to vector<1x16xf32>
    %250 = arith.mulf %248, %249 : vector<1x16xf32>
    %cst_64 = arith.constant 1.000000e+00 : f32
    %251 = vector.broadcast %cst_64 : f32 to vector<1x16xf32>
    %252 = arith.divf %251, %48 : vector<1x16xf32>
    %cst_65 = arith.constant 0.000000e+00 : f32
    %253 = vector.broadcast %cst_65 : f32 to vector<1x16xf32>
    %254 = arith.subf %253, %252 : vector<1x16xf32>
    %255 = math.log %122 : vector<1x16xf32>
    %256 = math.log %48 : vector<1x16xf32>
    %257 = arith.subf %255, %256 : vector<1x16xf32>
    %258 = arith.mulf %254, %257 : vector<1x16xf32>
    %cst_66 = arith.constant 1.44269502 : f32
    %259 = vector.broadcast %cst_66 : f32 to vector<1x16xf32>
    %260 = arith.mulf %258, %259 : vector<1x16xf32>
    %261 = arith.mulf %5, %5 : vector<1x16xf32>
    %cst_67 = arith.constant 1.000000e+00 : f32
    %262 = vector.broadcast %cst_67 : f32 to vector<1x16xf32>
    %263 = arith.divf %262, %30 : vector<1x16xf32>
    %cst_68 = arith.constant 0.000000e+00 : f32
    %264 = vector.broadcast %cst_68 : f32 to vector<1x16xf32>
    %265 = arith.subf %264, %263 : vector<1x16xf32>
    %266 = math.log %137 : vector<1x16xf32>
    %267 = math.log %30 : vector<1x16xf32>
    %268 = arith.subf %266, %267 : vector<1x16xf32>
    %269 = arith.mulf %265, %268 : vector<1x16xf32>
    %cst_69 = arith.constant 1.44269502 : f32
    %270 = vector.broadcast %cst_69 : f32 to vector<1x16xf32>
    %271 = arith.mulf %269, %270 : vector<1x16xf32>
    %cst_70 = arith.constant 1.000000e+00 : f32
    %272 = vector.broadcast %cst_70 : f32 to vector<1x16xf32>
    %273 = arith.divf %272, %48 : vector<1x16xf32>
    %cst_71 = arith.constant 0.000000e+00 : f32
    %274 = vector.broadcast %cst_71 : f32 to vector<1x16xf32>
    %275 = arith.subf %274, %273 : vector<1x16xf32>
    %276 = math.log %152 : vector<1x16xf32>
    %277 = math.log %48 : vector<1x16xf32>
    %278 = arith.subf %276, %277 : vector<1x16xf32>
    %279 = arith.mulf %275, %278 : vector<1x16xf32>
    %cst_72 = arith.constant 1.44269502 : f32
    %280 = vector.broadcast %cst_72 : f32 to vector<1x16xf32>
    %281 = arith.mulf %279, %280 : vector<1x16xf32>
    %c0_73 = arith.constant 0 : index
    %c0_74 = arith.constant 0 : index
    %282 = vector.load %arg5[%c0_73, %c0_74] : memref<30x16xf32, #tpu.memory_space<vmem>>, vector<1x16xf32>
    tpu.vector_store %arg5[%c0_73, %c0_74], %8 {strides = array<i32>} : memref<30x16xf32, #tpu.memory_space<vmem>>, vector<1x16xf32>,
    %c1_75 = arith.constant 1 : index
    %c0_76 = arith.constant 0 : index
    %283 = vector.load %arg5[%c1_75, %c0_76] : memref<30x16xf32, #tpu.memory_space<vmem>>, vector<1x16xf32>
    tpu.vector_store %arg5[%c1_75, %c0_76], %27 {strides = array<i32>} : memref<30x16xf32, #tpu.memory_space<vmem>>, vector<1x16xf32>,
    %c2 = arith.constant 2 : index
    %c0_77 = arith.constant 0 : index
    %284 = vector.load %arg5[%c2, %c0_77] : memref<30x16xf32, #tpu.memory_space<vmem>>, vector<1x16xf32>
    tpu.vector_store %arg5[%c2, %c0_77], %154 {strides = array<i32>} : memref<30x16xf32, #tpu.memory_space<vmem>>, vector<1x16xf32>,
    %c3 = arith.constant 3 : index
    %c0_78 = arith.constant 0 : index
    %285 = vector.load %arg5[%c3, %c0_78] : memref<30x16xf32, #tpu.memory_space<vmem>>, vector<1x16xf32>
    tpu.vector_store %arg5[%c3, %c0_78], %164 {strides = array<i32>} : memref<30x16xf32, #tpu.memory_space<vmem>>, vector<1x16xf32>,
    %c4 = arith.constant 4 : index
    %c0_79 = arith.constant 0 : index
    %286 = vector.load %arg5[%c4, %c0_79] : memref<30x16xf32, #tpu.memory_space<vmem>>, vector<1x16xf32>
    tpu.vector_store %arg5[%c4, %c0_79], %48 {strides = array<i32>} : memref<30x16xf32, #tpu.memory_space<vmem>>, vector<1x16xf32>,
    %c5 = arith.constant 5 : index
    %c0_80 = arith.constant 0 : index
    %287 = vector.load %arg5[%c5, %c0_80] : memref<30x16xf32, #tpu.memory_space<vmem>>, vector<1x16xf32>
    tpu.vector_store %arg5[%c5, %c0_80], %165 {strides = array<i32>} : memref<30x16xf32, #tpu.memory_space<vmem>>, vector<1x16xf32>,
    %c6 = arith.constant 6 : index
    %c0_81 = arith.constant 0 : index
    %288 = vector.load %arg5[%c6, %c0_81] : memref<30x16xf32, #tpu.memory_space<vmem>>, vector<1x16xf32>
    tpu.vector_store %arg5[%c6, %c0_81], %175 {strides = array<i32>} : memref<30x16xf32, #tpu.memory_space<vmem>>, vector<1x16xf32>,
    %c7 = arith.constant 7 : index
    %c0_82 = arith.constant 0 : index
    %289 = vector.load %arg5[%c7, %c0_82] : memref<30x16xf32, #tpu.memory_space<vmem>>, vector<1x16xf32>
    tpu.vector_store %arg5[%c7, %c0_82], %4 {strides = array<i32>} : memref<30x16xf32, #tpu.memory_space<vmem>>, vector<1x16xf32>,
    %c8 = arith.constant 8 : index
    %c0_83 = arith.constant 0 : index
    %290 = vector.load %arg5[%c8, %c0_83] : memref<30x16xf32, #tpu.memory_space<vmem>>, vector<1x16xf32>
    tpu.vector_store %arg5[%c8, %c0_83], %176 {strides = array<i32>} : memref<30x16xf32, #tpu.memory_space<vmem>>, vector<1x16xf32>,
    %c9 = arith.constant 9 : index
    %c0_84 = arith.constant 0 : index
    %291 = vector.load %arg5[%c9, %c0_84] : memref<30x16xf32, #tpu.memory_space<vmem>>, vector<1x16xf32>
    tpu.vector_store %arg5[%c9, %c0_84], %186 {strides = array<i32>} : memref<30x16xf32, #tpu.memory_space<vmem>>, vector<1x16xf32>,
    %c10 = arith.constant 10 : index
    %c0_85 = arith.constant 0 : index
    %292 = vector.load %arg5[%c10, %c0_85] : memref<30x16xf32, #tpu.memory_space<vmem>>, vector<1x16xf32>
    tpu.vector_store %arg5[%c10, %c0_85], %196 {strides = array<i32>} : memref<30x16xf32, #tpu.memory_space<vmem>>, vector<1x16xf32>,
    %c11 = arith.constant 11 : index
    %c0_86 = arith.constant 0 : index
    %293 = vector.load %arg5[%c11, %c0_86] : memref<30x16xf32, #tpu.memory_space<vmem>>, vector<1x16xf32>
    tpu.vector_store %arg5[%c11, %c0_86], %5 {strides = array<i32>} : memref<30x16xf32, #tpu.memory_space<vmem>>, vector<1x16xf32>,
    %c12 = arith.constant 12 : index
    %c0_87 = arith.constant 0 : index
    %294 = vector.load %arg5[%c12, %c0_87] : memref<30x16xf32, #tpu.memory_space<vmem>>, vector<1x16xf32>
    tpu.vector_store %arg5[%c12, %c0_87], %197 {strides = array<i32>} : memref<30x16xf32, #tpu.memory_space<vmem>>, vector<1x16xf32>,
    %c13 = arith.constant 13 : index
    %c0_88 = arith.constant 0 : index
    %295 = vector.load %arg5[%c13, %c0_88] : memref<30x16xf32, #tpu.memory_space<vmem>>, vector<1x16xf32>
    tpu.vector_store %arg5[%c13, %c0_88], %207 {strides = array<i32>} : memref<30x16xf32, #tpu.memory_space<vmem>>, vector<1x16xf32>,
    %c14 = arith.constant 14 : index
    %c0_89 = arith.constant 0 : index
    %296 = vector.load %arg5[%c14, %c0_89] : memref<30x16xf32, #tpu.memory_space<vmem>>, vector<1x16xf32>
    tpu.vector_store %arg5[%c14, %c0_89], %217 {strides = array<i32>} : memref<30x16xf32, #tpu.memory_space<vmem>>, vector<1x16xf32>,
    %c15 = arith.constant 15 : index
    %c0_90 = arith.constant 0 : index
    %297 = vector.load %arg5[%c15, %c0_90] : memref<30x16xf32, #tpu.memory_space<vmem>>, vector<1x16xf32>
    tpu.vector_store %arg5[%c15, %c0_90], %8 {strides = array<i32>} : memref<30x16xf32, #tpu.memory_space<vmem>>, vector<1x16xf32>,
    %c16 = arith.constant 16 : index
    %c0_91 = arith.constant 0 : index
    %298 = vector.load %arg5[%c16, %c0_91] : memref<30x16xf32, #tpu.memory_space<vmem>>, vector<1x16xf32>
    tpu.vector_store %arg5[%c16, %c0_91], %33 {strides = array<i32>} : memref<30x16xf32, #tpu.memory_space<vmem>>, vector<1x16xf32>,
    %c17 = arith.constant 17 : index
    %c0_92 = arith.constant 0 : index
    %299 = vector.load %arg5[%c17, %c0_92] : memref<30x16xf32, #tpu.memory_space<vmem>>, vector<1x16xf32>
    tpu.vector_store %arg5[%c17, %c0_92], %218 {strides = array<i32>} : memref<30x16xf32, #tpu.memory_space<vmem>>, vector<1x16xf32>,
    %c18 = arith.constant 18 : index
    %c0_93 = arith.constant 0 : index
    %300 = vector.load %arg5[%c18, %c0_93] : memref<30x16xf32, #tpu.memory_space<vmem>>, vector<1x16xf32>
    tpu.vector_store %arg5[%c18, %c0_93], %228 {strides = array<i32>} : memref<30x16xf32, #tpu.memory_space<vmem>>, vector<1x16xf32>,
    %c19 = arith.constant 19 : index
    %c0_94 = arith.constant 0 : index
    %301 = vector.load %arg5[%c19, %c0_94] : memref<30x16xf32, #tpu.memory_space<vmem>>, vector<1x16xf32>
    tpu.vector_store %arg5[%c19, %c0_94], %46 {strides = array<i32>} : memref<30x16xf32, #tpu.memory_space<vmem>>, vector<1x16xf32>,
    %c20 = arith.constant 20 : index
    %c0_95 = arith.constant 0 : index
    %302 = vector.load %arg5[%c20, %c0_95] : memref<30x16xf32, #tpu.memory_space<vmem>>, vector<1x16xf32>
    tpu.vector_store %arg5[%c20, %c0_95], %229 {strides = array<i32>} : memref<30x16xf32, #tpu.memory_space<vmem>>, vector<1x16xf32>,
    %c21 = arith.constant 21 : index
    %c0_96 = arith.constant 0 : index
    %303 = vector.load %arg5[%c21, %c0_96] : memref<30x16xf32, #tpu.memory_space<vmem>>, vector<1x16xf32>
    tpu.vector_store %arg5[%c21, %c0_96], %239 {strides = array<i32>} : memref<30x16xf32, #tpu.memory_space<vmem>>, vector<1x16xf32>,
    %c22 = arith.constant 22 : index
    %c0_97 = arith.constant 0 : index
    %304 = vector.load %arg5[%c22, %c0_97] : memref<30x16xf32, #tpu.memory_space<vmem>>, vector<1x16xf32>
    tpu.vector_store %arg5[%c22, %c0_97], %4 {strides = array<i32>} : memref<30x16xf32, #tpu.memory_space<vmem>>, vector<1x16xf32>,
    %c23 = arith.constant 23 : index
    %c0_98 = arith.constant 0 : index
    %305 = vector.load %arg5[%c23, %c0_98] : memref<30x16xf32, #tpu.memory_space<vmem>>, vector<1x16xf32>
    tpu.vector_store %arg5[%c23, %c0_98], %240 {strides = array<i32>} : memref<30x16xf32, #tpu.memory_space<vmem>>, vector<1x16xf32>,
    %c24 = arith.constant 24 : index
    %c0_99 = arith.constant 0 : index
    %306 = vector.load %arg5[%c24, %c0_99] : memref<30x16xf32, #tpu.memory_space<vmem>>, vector<1x16xf32>
    tpu.vector_store %arg5[%c24, %c0_99], %250 {strides = array<i32>} : memref<30x16xf32, #tpu.memory_space<vmem>>, vector<1x16xf32>,
    %c25 = arith.constant 25 : index
    %c0_100 = arith.constant 0 : index
    %307 = vector.load %arg5[%c25, %c0_100] : memref<30x16xf32, #tpu.memory_space<vmem>>, vector<1x16xf32>
    tpu.vector_store %arg5[%c25, %c0_100], %260 {strides = array<i32>} : memref<30x16xf32, #tpu.memory_space<vmem>>, vector<1x16xf32>,
    %c26 = arith.constant 26 : index
    %c0_101 = arith.constant 0 : index
    %308 = vector.load %arg5[%c26, %c0_101] : memref<30x16xf32, #tpu.memory_space<vmem>>, vector<1x16xf32>
    tpu.vector_store %arg5[%c26, %c0_101], %5 {strides = array<i32>} : memref<30x16xf32, #tpu.memory_space<vmem>>, vector<1x16xf32>,
    %c27 = arith.constant 27 : index
    %c0_102 = arith.constant 0 : index
    %309 = vector.load %arg5[%c27, %c0_102] : memref<30x16xf32, #tpu.memory_space<vmem>>, vector<1x16xf32>
    tpu.vector_store %arg5[%c27, %c0_102], %261 {strides = array<i32>} : memref<30x16xf32, #tpu.memory_space<vmem>>, vector<1x16xf32>,
    %c28 = arith.constant 28 : index
    %c0_103 = arith.constant 0 : index
    %310 = vector.load %arg5[%c28, %c0_103] : memref<30x16xf32, #tpu.memory_space<vmem>>, vector<1x16xf32>
    tpu.vector_store %arg5[%c28, %c0_103], %271 {strides = array<i32>} : memref<30x16xf32, #tpu.memory_space<vmem>>, vector<1x16xf32>,
    %c29 = arith.constant 29 : index
    %c0_104 = arith.constant 0 : index
    %311 = vector.load %arg5[%c29, %c0_104] : memref<30x16xf32, #tpu.memory_space<vmem>>, vector<1x16xf32>
    tpu.vector_store %arg5[%c29, %c0_104], %281 {strides = array<i32>} : memref<30x16xf32, #tpu.memory_space<vmem>>, vector<1x16xf32>,
    return
  }
}

</mosaic_0001>

<llo_original>
// kernel: tpu_custom_call.1
$region0: #{tpu_custom_call.1}
  #allocation0 [shape = 'u32[]', space=smem, size = 0x4, offset = 0x4, fixed_abs, tag = 'smem constant byte address 0x4 - core index']
  #allocation1 [shape = 'u32[144,128]{1,0:T(1,128)}', space=vmem, size = 0x12000, scoped, tag = 'internal scratch']
  %s0 = inlined_call_operand.vmem [shape: s32[2,16], index: 0, kind: input, shape index: {}]
  %s1 = inlined_call_operand.vmem [shape: s32[16,2], index: 1, kind: input, shape index: {}]
  %s2 = inlined_call_operand.vmem [shape: f32[1,16], index: 2, kind: input, shape index: {}]
  %s3 = inlined_call_operand.vmem [shape: f32[1,16], index: 3, kind: input, shape index: {}]
  %s4 = inlined_call_operand.vmem [shape: f32[16,2], index: 4, kind: input, shape index: {}]
  %s5 = inlined_call_operand.vmem [shape: f32[30,16], index: 5, kind: output, shape index: {}]
  %s6 = sld [smem:[#allocation0]]
  $region30: #{tpu_custom_call.1} parent=0
    _
  %s8 = ssub.s32 1, %s6
  %s9 = scalar_select 0, %s8, %s6
  // Predicated region
  $region2: #{tpu_custom_call.1} parent=0 // pred_check
    _
  $region3: #{tpu_custom_call.1} parent=0 // pred_check_branch
    %11 = sbr.rel (0) target = $region5
  $region4: #{tpu_custom_call.1} parent=0 // pred_region
    _
  $region5: #{tpu_custom_call.1} parent=0 // pred_fallthru
    _
  // Predicated region
  $region6: #{tpu_custom_call.1} parent=0 // pred_check
    _
  $region7: #{tpu_custom_call.1} parent=0 // pred_check_branch
    %13 = sbr.rel (0) target = $region9
  $region8: #{tpu_custom_call.1} parent=0 // pred_region
    _
  $region9: #{tpu_custom_call.1} parent=0 // pred_fallthru
    _
  // Predicated region
  $region10: #{tpu_custom_call.1} parent=0 // pred_check
    _
  $region11: #{tpu_custom_call.1} parent=0 // pred_check_branch
    %15 = sbr.rel (0) target = $region13
  $region12: #{tpu_custom_call.1} parent=0 // pred_region
    _
  $region13: #{tpu_custom_call.1} parent=0 // pred_fallthru
    _
  // Predicated region
  $region14: #{tpu_custom_call.1} parent=0 // pred_check
    _
  $region15: #{tpu_custom_call.1} parent=0 // pred_check_branch
    %17 = sbr.rel (0) target = $region17
  $region16: #{tpu_custom_call.1} parent=0 // pred_region
    _
  $region17: #{tpu_custom_call.1} parent=0 // pred_fallthru
    _
  // Predicated region
  $region18: #{tpu_custom_call.1} parent=0 // pred_check
    _
  $region19: #{tpu_custom_call.1} parent=0 // pred_check_branch
    %19 = sbr.rel (0) target = $region21
  $region20: #{tpu_custom_call.1} parent=0 // pred_region
    _
  $region21: #{tpu_custom_call.1} parent=0 // pred_fallthru
    _
  %v20 = vld [vmem:[%s0] sm:$0x1]
  %v21 = vld [vmem:[%s0 + $0x1] sm:$0x1]
  %v22 = vld [vmem:[%s1] sm:$0xff]
  %v23 = vld [vmem:[%s1 + $0x8] sm:$0xff]
  %v24 = vld [vmem:[%s2] sm:$0x1]
  %v25 = vld [vmem:[%s3] sm:$0x1]
  %v26 = vld [vmem:[%s4] sm:$0xff]
  %v27 = vld [vmem:[%s4 + $0x8] sm:$0xff]
  %28 = vset.pattern.permute.xlu0 1
  %29 = vperm.xlu0 %28, %v22
  %v30 = vpop.permute.xlu0 %29
  %31 = vset.pattern.permute.xlu0 1
  %32 = vperm.xlu0 %31, %v23
  %v33 = vpop.permute.xlu0 %32
  %v34 = vlaneseq
  %v35 = vshrl.u32 %v34, 7
  %v36 = vsub.s32 0, %v35
  %v37 = vrot.slane %v21, %v36
  %vm38 = vcmp.eq.s32.totalorder %v30, %v37
  %vm39 = vcmp.eq.s32.totalorder %v33, %v37
  %40 = vset.pattern.permute.xlu0 0
  %41 = vperm.xlu0 %40, %v22
  %v42 = vpop.permute.xlu0 %41
  %43 = vset.pattern.permute.xlu0 0
  %44 = vperm.xlu0 %43, %v23
  %v45 = vpop.permute.xlu0 %44
  %v46 = vlaneseq
  %v47 = vshrl.u32 %v46, 7
  %v48 = vsub.s32 0, %v47
  %v49 = vrot.slane %v20, %v48
  %vm50 = vcmp.eq.s32.totalorder %v42, %v49
  %vm51 = vcmp.eq.s32.totalorder %v45, %v49
  %vm52 = vcmp.eq.s32.totalorder %v30, %v49
  %vm53 = vcmp.eq.s32.totalorder %v33, %v49
  %vm54 = vcmp.eq.s32.totalorder %v42, %v37
  %vm55 = vcmp.eq.s32.totalorder %v45, %v37
  %v56 = vsel %vm38, 1, 0
  %v57 = vsel %vm39, 1, 0
  %v58 = vcvt.s32.f32 %v56
  %v59 = vcvt.s32.f32 %v57
  %vm60 = vcmask 130048
  %v62 = vsel %vm60, 1.0, 0
  %64 = vmatprep.subr.mxu0 0.0
  %65 = vmatpush1.msra.mxu0 0.0
  %66 = vmatprep.subr.mxu0 0.0
  %67 = vmatpush1.msra.mxu0 0.0
  %68 = vmatprep.subr.mxu0 0.0
  %69 = vmatpush1.msra.mxu0 0.0
  %70 = vmatprep.subr.mxu0 0.0
  %71 = vmatpush1.msra.mxu0 0.0
  %72 = vmatprep.subr.mxu0 0.0
  %73 = vmatpush1.msra.mxu0 0.0
  %74 = vmatprep.subr.mxu0 0.0
  %75 = vmatpush1.msra.mxu0 0.0
  %76 = vmatprep.subr.mxu0 0.0
  %77 = vmatpush1.msra.mxu0 0.0
  %78 = vmatprep.subr.mxu0 0.0
  %79 = vmatpush1.msra.mxu0 0.0
  %80 = vmatprep.subr.mxu0 0.0
  %81 = vmatpush1.msra.mxu0 0.0
  %82 = vmatprep.subr.mxu0 0.0
  %83 = vmatpush1.msra.mxu0 0.0
  %84 = vmatprep.subr.mxu0 0.0
  %85 = vmatpush1.msra.mxu0 0.0
  %86 = vmatprep.subr.mxu0 0.0
  %87 = vmatpush1.msra.mxu0 0.0
  %88 = vmatprep.subr.mxu0 0.0
  %89 = vmatpush1.msra.mxu0 0.0
  %90 = vmatprep.subr.mxu0 0.0
  %91 = vmatpush1.msra.mxu0 0.0
  %92 = vmatprep.subr.mxu0 0.0
  %93 = vmatpush1.msra.mxu0 %v59
  %94 = vmatprep.subr.mxu0 0.0
  %95 = vmatpush1.msra.mxu0 %v58
  %96 = vmatprep.subr.mxu0 0.0
  %97 = vmatpush2.msra.mxu0 0.0
  %98 = vmatprep.subr.mxu0 0.0
  %99 = vmatpush2.msra.mxu0 0.0
  %100 = vmatprep.subr.mxu0 0.0
  %101 = vmatpush2.msra.mxu0 0.0
  %102 = vmatprep.subr.mxu0 0.0
  %103 = vmatpush2.msra.mxu0 0.0
  %104 = vmatprep.subr.mxu0 0.0
  %105 = vmatpush2.msra.mxu0 0.0
  %106 = vmatprep.subr.mxu0 0.0
  %107 = vmatpush2.msra.mxu0 0.0
  %108 = vmatprep.subr.mxu0 0.0
  %109 = vmatpush2.msra.mxu0 0.0
  %110 = vmatprep.subr.mxu0 0.0
  %111 = vmatpush2.msra.mxu0 0.0
  %112 = vmatprep.subr.mxu0 0.0
  %113 = vmatpush2.msra.mxu0 0.0
  %114 = vmatprep.subr.mxu0 0.0
  %115 = vmatpush2.msra.mxu0 0.0
  %116 = vmatprep.subr.mxu0 0.0
  %117 = vmatpush2.msra.mxu0 0.0
  %118 = vmatprep.subr.mxu0 0.0
  %119 = vmatpush2.msra.mxu0 0.0
  %120 = vmatprep.subr.mxu0 0.0
  %121 = vmatpush2.msra.mxu0 0.0
  %122 = vmatprep.subr.mxu0 0.0
  %123 = vmatpush2.msra.mxu0 0.0
  %124 = vmatprep.subr.mxu0 0.0
  %125 = vmatpush2.msra.mxu0 0.0
  %126 = vmatprep.subr.mxu0 0.0
  %127 = vmatpush2.msra.mxu0 0.0
  %128 = vmatprep.mubr.f32.mxu0 0.0
  %129 = vmatmul.mubr.f32.gmra.mxu0 %v62
  %v130 = vpop.f32.mrf.mxu0
  %v131 = vadd.f32 0.0, %v130
  %v132 = vpop.f32.mrf.mxu0
  %133 = vdwg.mxu0
  %v134 = vsel %vm52, 1, 0
  %v135 = vsel %vm53, 1, 0
  %v136 = vcvt.s32.f32 %v134
  %v137 = vcvt.s32.f32 %v135
  %138 = vmatprep.subr.mxu0 0.0
  %139 = vmatpush1.msra.mxu0 0.0
  %140 = vmatprep.subr.mxu0 0.0
  %141 = vmatpush1.msra.mxu0 0.0
  %142 = vmatprep.subr.mxu0 0.0
  %143 = vmatpush1.msra.mxu0 0.0
  %144 = vmatprep.subr.mxu0 0.0
  %145 = vmatpush1.msra.mxu0 0.0
  %146 = vmatprep.subr.mxu0 0.0
  %147 = vmatpush1.msra.mxu0 0.0
  %148 = vmatprep.subr.mxu0 0.0
  %149 = vmatpush1.msra.mxu0 0.0
  %150 = vmatprep.subr.mxu0 0.0
  %151 = vmatpush1.msra.mxu0 0.0
  %152 = vmatprep.subr.mxu0 0.0
  %153 = vmatpush1.msra.mxu0 0.0
  %154 = vmatprep.subr.mxu0 0.0
  %155 = vmatpush1.msra.mxu0 0.0
  %156 = vmatprep.subr.mxu0 0.0
  %157 = vmatpush1.msra.mxu0 0.0
  %158 = vmatprep.subr.mxu0 0.0
  %159 = vmatpush1.msra.mxu0 0.0
  %160 = vmatprep.subr.mxu0 0.0
  %161 = vmatpush1.msra.mxu0 0.0
  %162 = vmatprep.subr.mxu0 0.0
  %163 = vmatpush1.msra.mxu0 0.0
  %164 = vmatprep.subr.mxu0 0.0
  %165 = vmatpush1.msra.mxu0 0.0
  %166 = vmatprep.subr.mxu0 0.0
  %167 = vmatpush1.msra.mxu0 %v137
  %168 = vmatprep.subr.mxu0 0.0
  %169 = vmatpush1.msra.mxu0 %v136
  %170 = vmatprep.subr.mxu0 0.0
  %171 = vmatpush2.msra.mxu0 0.0
  %172 = vmatprep.subr.mxu0 0.0
  %173 = vmatpush2.msra.mxu0 0.0
  %174 = vmatprep.subr.mxu0 0.0
  %175 = vmatpush2.msra.mxu0 0.0
  %176 = vmatprep.subr.mxu0 0.0
  %177 = vmatpush2.msra.mxu0 0.0
  %178 = vmatprep.subr.mxu0 0.0
  %179 = vmatpush2.msra.mxu0 0.0
  %180 = vmatprep.subr.mxu0 0.0
  %181 = vmatpush2.msra.mxu0 0.0
  %182 = vmatprep.subr.mxu0 0.0
  %183 = vmatpush2.msra.mxu0 0.0
  %184 = vmatprep.subr.mxu0 0.0
  %185 = vmatpush2.msra.mxu0 0.0
  %186 = vmatprep.subr.mxu0 0.0
  %187 = vmatpush2.msra.mxu0 0.0
  %188 = vmatprep.subr.mxu0 0.0
  %189 = vmatpush2.msra.mxu0 0.0
  %190 = vmatprep.subr.mxu0 0.0
  %191 = vmatpush2.msra.mxu0 0.0
  %192 = vmatprep.subr.mxu0 0.0
  %193 = vmatpush2.msra.mxu0 0.0
  %194 = vmatprep.subr.mxu0 0.0
  %195 = vmatpush2.msra.mxu0 0.0
  %196 = vmatprep.subr.mxu0 0.0
  %197 = vmatpush2.msra.mxu0 0.0
  %198 = vmatprep.subr.mxu0 0.0
  %199 = vmatpush2.msra.mxu0 0.0
  %200 = vmatprep.subr.mxu0 0.0
  %201 = vmatpush2.msra.mxu0 0.0
  %202 = vmatprep.mubr.f32.mxu0 0.0
  %203 = vmatmul.mubr.f32.gmra.mxu0 %v62
  %v204 = vpop.f32.mrf.mxu0
  %v205 = vadd.f32 0.0, %v204
  %v206 = vpop.f32.mrf.mxu0
  %207 = vdwg.mxu0
  %v208 = vsel %vm50, 1, 0
  %v209 = vsel %vm51, 1, 0
  %v210 = vcvt.s32.f32 %v208
  %v211 = vcvt.s32.f32 %v209
  %212 = vmatprep.subr.mxu0 0.0
  %213 = vmatpush1.msra.mxu0 0.0
  %214 = vmatprep.subr.mxu0 0.0
  %215 = vmatpush1.msra.mxu0 0.0
  %216 = vmatprep.subr.mxu0 0.0
  %217 = vmatpush1.msra.mxu0 0.0
  %218 = vmatprep.subr.mxu0 0.0
  %219 = vmatpush1.msra.mxu0 0.0
  %220 = vmatprep.subr.mxu0 0.0
  %221 = vmatpush1.msra.mxu0 0.0
  %222 = vmatprep.subr.mxu0 0.0
  %223 = vmatpush1.msra.mxu0 0.0
  %224 = vmatprep.subr.mxu0 0.0
  %225 = vmatpush1.msra.mxu0 0.0
  %226 = vmatprep.subr.mxu0 0.0
  %227 = vmatpush1.msra.mxu0 0.0
  %228 = vmatprep.subr.mxu0 0.0
  %229 = vmatpush1.msra.mxu0 0.0
  %230 = vmatprep.subr.mxu0 0.0
  %231 = vmatpush1.msra.mxu0 0.0
  %232 = vmatprep.subr.mxu0 0.0
  %233 = vmatpush1.msra.mxu0 0.0
  %234 = vmatprep.subr.mxu0 0.0
  %235 = vmatpush1.msra.mxu0 0.0
  %236 = vmatprep.subr.mxu0 0.0
  %237 = vmatpush1.msra.mxu0 0.0
  %238 = vmatprep.subr.mxu0 0.0
  %239 = vmatpush1.msra.mxu0 0.0
  %240 = vmatprep.subr.mxu0 0.0
  %241 = vmatpush1.msra.mxu0 %v211
  %242 = vmatprep.subr.mxu0 0.0
  %243 = vmatpush1.msra.mxu0 %v210
  %244 = vmatprep.subr.mxu0 0.0
  %245 = vmatpush2.msra.mxu0 0.0
  %246 = vmatprep.subr.mxu0 0.0
  %247 = vmatpush2.msra.mxu0 0.0
  %248 = vmatprep.subr.mxu0 0.0
  %249 = vmatpush2.msra.mxu0 0.0
  %250 = vmatprep.subr.mxu0 0.0
  %251 = vmatpush2.msra.mxu0 0.0
  %252 = vmatprep.subr.mxu0 0.0
  %253 = vmatpush2.msra.mxu0 0.0
  %254 = vmatprep.subr.mxu0 0.0
  %255 = vmatpush2.msra.mxu0 0.0
  %256 = vmatprep.subr.mxu0 0.0
  %257 = vmatpush2.msra.mxu0 0.0
  %258 = vmatprep.subr.mxu0 0.0
  %259 = vmatpush2.msra.mxu0 0.0
  %260 = vmatprep.subr.mxu0 0.0
  %261 = vmatpush2.msra.mxu0 0.0
  %262 = vmatprep.subr.mxu0 0.0
  %263 = vmatpush2.msra.mxu0 0.0
  %264 = vmatprep.subr.mxu0 0.0
  %265 = vmatpush2.msra.mxu0 0.0
  %266 = vmatprep.subr.mxu0 0.0
  %267 = vmatpush2.msra.mxu0 0.0
  %268 = vmatprep.subr.mxu0 0.0
  %269 = vmatpush2.msra.mxu0 0.0
  %270 = vmatprep.subr.mxu0 0.0
  %271 = vmatpush2.msra.mxu0 0.0
  %272 = vmatprep.subr.mxu0 0.0
  %273 = vmatpush2.msra.mxu0 0.0
  %274 = vmatprep.subr.mxu0 0.0
  %275 = vmatpush2.msra.mxu0 0.0
  %276 = vmatprep.mubr.f32.mxu0 0.0
  %277 = vmatmul.mubr.f32.gmra.mxu0 %v62
  %v278 = vpop.f32.mrf.mxu0
  %v279 = vadd.f32 0.0, %v278
  %v280 = vpop.f32.mrf.mxu0
  %281 = vdwg.mxu0
  %v282 = vsel %vm54, 1, 0
  %v283 = vsel %vm55, 1, 0
  %v284 = vcvt.s32.f32 %v282
  %v285 = vcvt.s32.f32 %v283
  %286 = vmatprep.subr.mxu0 0.0
  %287 = vmatpush1.msra.mxu0 0.0
  %288 = vmatprep.subr.mxu0 0.0
  %289 = vmatpush1.msra.mxu0 0.0
  %290 = vmatprep.subr.mxu0 0.0
  %291 = vmatpush1.msra.mxu0 0.0
  %292 = vmatprep.subr.mxu0 0.0
  %293 = vmatpush1.msra.mxu0 0.0
  %294 = vmatprep.subr.mxu0 0.0
  %295 = vmatpush1.msra.mxu0 0.0
  %296 = vmatprep.subr.mxu0 0.0
  %297 = vmatpush1.msra.mxu0 0.0
  %298 = vmatprep.subr.mxu0 0.0
  %299 = vmatpush1.msra.mxu0 0.0
  %300 = vmatprep.subr.mxu0 0.0
  %301 = vmatpush1.msra.mxu0 0.0
  %302 = vmatprep.subr.mxu0 0.0
  %303 = vmatpush1.msra.mxu0 0.0
  %304 = vmatprep.subr.mxu0 0.0
  %305 = vmatpush1.msra.mxu0 0.0
  %306 = vmatprep.subr.mxu0 0.0
  %307 = vmatpush1.msra.mxu0 0.0
  %308 = vmatprep.subr.mxu0 0.0
  %309 = vmatpush1.msra.mxu0 0.0
  %310 = vmatprep.subr.mxu0 0.0
  %311 = vmatpush1.msra.mxu0 0.0
  %312 = vmatprep.subr.mxu0 0.0
  %313 = vmatpush1.msra.mxu0 0.0
  %314 = vmatprep.subr.mxu0 0.0
  %315 = vmatpush1.msra.mxu0 %v285
  %316 = vmatprep.subr.mxu0 0.0
  %317 = vmatpush1.msra.mxu0 %v284
  %318 = vmatprep.subr.mxu0 0.0
  %319 = vmatpush2.msra.mxu0 0.0
  %320 = vmatprep.subr.mxu0 0.0
  %321 = vmatpush2.msra.mxu0 0.0
  %322 = vmatprep.subr.mxu0 0.0
  %323 = vmatpush2.msra.mxu0 0.0
  %324 = vmatprep.subr.mxu0 0.0
  %325 = vmatpush2.msra.mxu0 0.0
  %326 = vmatprep.subr.mxu0 0.0
  %327 = vmatpush2.msra.mxu0 0.0
  %328 = vmatprep.subr.mxu0 0.0
  %329 = vmatpush2.msra.mxu0 0.0
  %330 = vmatprep.subr.mxu0 0.0
  %331 = vmatpush2.msra.mxu0 0.0
  %332 = vmatprep.subr.mxu0 0.0
  %333 = vmatpush2.msra.mxu0 0.0
  %334 = vmatprep.subr.mxu0 0.0
  %335 = vmatpush2.msra.mxu0 0.0
  %336 = vmatprep.subr.mxu0 0.0
  %337 = vmatpush2.msra.mxu0 0.0
  %338 = vmatprep.subr.mxu0 0.0
  %339 = vmatpush2.msra.mxu0 0.0
  %340 = vmatprep.subr.mxu0 0.0
  %341 = vmatpush2.msra.mxu0 0.0
  %342 = vmatprep.subr.mxu0 0.0
  %343 = vmatpush2.msra.mxu0 0.0
  %344 = vmatprep.subr.mxu0 0.0
  %345 = vmatpush2.msra.mxu0 0.0
  %346 = vmatprep.subr.mxu0 0.0
  %347 = vmatpush2.msra.mxu0 0.0
  %348 = vmatprep.subr.mxu0 0.0
  %349 = vmatpush2.msra.mxu0 0.0
  %350 = vmatprep.mubr.f32.mxu0 0.0
  %351 = vmatmul.mubr.f32.gmra.mxu0 %v62
  %v352 = vpop.f32.mrf.mxu0
  %v353 = vadd.f32 0.0, %v352
  %v354 = vpop.f32.mrf.mxu0
  %355 = vdwg.mxu0
  %v357 = vsel %vm60, %v284, 0
  %v360 = vsel %vm60, %v285, 0
  %362 = vmatprep.subr.mxu0 0.0
  %363 = vmatpush1.msra.mxu0 0.0
  %364 = vmatprep.subr.mxu0 0.0
  %365 = vmatpush1.msra.mxu0 0.0
  %366 = vmatprep.subr.mxu0 0.0
  %367 = vmatpush1.msra.mxu0 0.0
  %368 = vmatprep.subr.mxu0 0.0
  %369 = vmatpush1.msra.mxu0 0.0
  %370 = vmatprep.subr.mxu0 0.0
  %371 = vmatpush1.msra.mxu0 0.0
  %372 = vmatprep.subr.mxu0 0.0
  %373 = vmatpush1.msra.mxu0 0.0
  %374 = vmatprep.subr.mxu0 0.0
  %375 = vmatpush1.msra.mxu0 0.0
  %376 = vmatprep.subr.mxu0 0.0
  %377 = vmatpush1.msra.mxu0 0.0
  %378 = vmatprep.subr.mxu0 0.0
  %379 = vmatpush1.msra.mxu0 0.0
  %380 = vmatprep.subr.mxu0 0.0
  %381 = vmatpush1.msra.mxu0 0.0
  %382 = vmatprep.subr.mxu0 0.0
  %383 = vmatpush1.msra.mxu0 0.0
  %384 = vmatprep.subr.mxu0 0.0
  %385 = vmatpush1.msra.mxu0 0.0
  %386 = vmatprep.subr.mxu0 0.0
  %387 = vmatpush1.msra.mxu0 0.0
  %388 = vmatprep.subr.mxu0 0.0
  %389 = vmatpush1.msra.mxu0 0.0
  %390 = vmatprep.subr.mxu0 0.0
  %391 = vmatpush1.msra.mxu0 1.0
  %392 = vmatprep.subr.mxu0 0.0
  %393 = vmatpush1.msra.mxu0 1.0
  %394 = vmatprep.subr.mxu0 0.0
  %395 = vmatpush2.msra.mxu0 0.0
  %396 = vmatprep.subr.mxu0 0.0
  %397 = vmatpush2.msra.mxu0 0.0
  %398 = vmatprep.subr.mxu0 0.0
  %399 = vmatpush2.msra.mxu0 0.0
  %400 = vmatprep.subr.mxu0 0.0
  %401 = vmatpush2.msra.mxu0 0.0
  %402 = vmatprep.subr.mxu0 0.0
  %403 = vmatpush2.msra.mxu0 0.0
  %404 = vmatprep.subr.mxu0 0.0
  %405 = vmatpush2.msra.mxu0 0.0
  %406 = vmatprep.subr.mxu0 0.0
  %407 = vmatpush2.msra.mxu0 0.0
  %408 = vmatprep.subr.mxu0 0.0
  %409 = vmatpush2.msra.mxu0 0.0
  %410 = vmatprep.subr.mxu0 0.0
  %411 = vmatpush2.msra.mxu0 0.0
  %412 = vmatprep.subr.mxu0 0.0
  %413 = vmatpush2.msra.mxu0 0.0
  %414 = vmatprep.subr.mxu0 0.0
  %415 = vmatpush2.msra.mxu0 0.0
  %416 = vmatprep.subr.mxu0 0.0
  %417 = vmatpush2.msra.mxu0 0.0
  %418 = vmatprep.subr.mxu0 0.0
  %419 = vmatpush2.msra.mxu0 0.0
  %420 = vmatprep.subr.mxu0 0.0
  %421 = vmatpush2.msra.mxu0 0.0
  %422 = vmatprep.subr.mxu0 0.0
  %423 = vmatpush2.msra.mxu0 0.0
  %424 = vmatprep.subr.mxu0 0.0
  %425 = vmatpush2.msra.mxu0 0.0
  %426 = vmatprep.mubr.f32.mxu0 0.0
  %427 = vmatmul.mubr.f32.gmra.mxu0 %v357
  %v428 = vpop.f32.mrf.mxu0
  %v429 = vadd.f32 0.0, %v428
  %v430 = vpop.f32.mrf.mxu0
  %431 = vmatprep.mubr.f32.mxu0 0.0
  %432 = vmatmul.mubr.f32.gmra.mxu0 %v360
  %v433 = vpop.f32.mrf.mxu0
  %v434 = vadd.f32 0.0, %v433
  %v435 = vpop.f32.mrf.mxu0
  %436 = vdwg.mxu0
  %v438 = vsel %vm60, %v210, 0
  %v441 = vsel %vm60, %v211, 0
  %443 = vmatprep.subr.mxu0 0.0
  %444 = vmatpush1.msra.mxu0 0.0
  %445 = vmatprep.subr.mxu0 0.0
  %446 = vmatpush1.msra.mxu0 0.0
  %447 = vmatprep.subr.mxu0 0.0
  %448 = vmatpush1.msra.mxu0 0.0
  %449 = vmatprep.subr.mxu0 0.0
  %450 = vmatpush1.msra.mxu0 0.0
  %451 = vmatprep.subr.mxu0 0.0
  %452 = vmatpush1.msra.mxu0 0.0
  %453 = vmatprep.subr.mxu0 0.0
  %454 = vmatpush1.msra.mxu0 0.0
  %455 = vmatprep.subr.mxu0 0.0
  %456 = vmatpush1.msra.mxu0 0.0
  %457 = vmatprep.subr.mxu0 0.0
  %458 = vmatpush1.msra.mxu0 0.0
  %459 = vmatprep.subr.mxu0 0.0
  %460 = vmatpush1.msra.mxu0 0.0
  %461 = vmatprep.subr.mxu0 0.0
  %462 = vmatpush1.msra.mxu0 0.0
  %463 = vmatprep.subr.mxu0 0.0
  %464 = vmatpush1.msra.mxu0 0.0
  %465 = vmatprep.subr.mxu0 0.0
  %466 = vmatpush1.msra.mxu0 0.0
  %467 = vmatprep.subr.mxu0 0.0
  %468 = vmatpush1.msra.mxu0 0.0
  %469 = vmatprep.subr.mxu0 0.0
  %470 = vmatpush1.msra.mxu0 0.0
  %471 = vmatprep.subr.mxu0 0.0
  %472 = vmatpush1.msra.mxu0 1.0
  %473 = vmatprep.subr.mxu0 0.0
  %474 = vmatpush1.msra.mxu0 1.0
  %475 = vmatprep.subr.mxu0 0.0
  %476 = vmatpush2.msra.mxu0 0.0
  %477 = vmatprep.subr.mxu0 0.0
  %478 = vmatpush2.msra.mxu0 0.0
  %479 = vmatprep.subr.mxu0 0.0
  %480 = vmatpush2.msra.mxu0 0.0
  %481 = vmatprep.subr.mxu0 0.0
  %482 = vmatpush2.msra.mxu0 0.0
  %483 = vmatprep.subr.mxu0 0.0
  %484 = vmatpush2.msra.mxu0 0.0
  %485 = vmatprep.subr.mxu0 0.0
  %486 = vmatpush2.msra.mxu0 0.0
  %487 = vmatprep.subr.mxu0 0.0
  %488 = vmatpush2.msra.mxu0 0.0
  %489 = vmatprep.subr.mxu0 0.0
  %490 = vmatpush2.msra.mxu0 0.0
  %491 = vmatprep.subr.mxu0 0.0
  %492 = vmatpush2.msra.mxu0 0.0
  %493 = vmatprep.subr.mxu0 0.0
  %494 = vmatpush2.msra.mxu0 0.0
  %495 = vmatprep.subr.mxu0 0.0
  %496 = vmatpush2.msra.mxu0 0.0
  %497 = vmatprep.subr.mxu0 0.0
  %498 = vmatpush2.msra.mxu0 0.0
  %499 = vmatprep.subr.mxu0 0.0
  %500 = vmatpush2.msra.mxu0 0.0
  %501 = vmatprep.subr.mxu0 0.0
  %502 = vmatpush2.msra.mxu0 0.0
  %503 = vmatprep.subr.mxu0 0.0
  %504 = vmatpush2.msra.mxu0 0.0
  %505 = vmatprep.subr.mxu0 0.0
  %506 = vmatpush2.msra.mxu0 0.0
  %507 = vmatprep.mubr.f32.mxu0 0.0
  %508 = vmatmul.mubr.f32.gmra.mxu0 %v438
  %v509 = vpop.f32.mrf.mxu0
  %v510 = vadd.f32 0.0, %v509
  %v511 = vpop.f32.mrf.mxu0
  %512 = vmatprep.mubr.f32.mxu0 0.0
  %513 = vmatmul.mubr.f32.gmra.mxu0 %v441
  %v514 = vpop.f32.mrf.mxu0
  %v515 = vadd.f32 0.0, %v514
  %v516 = vpop.f32.mrf.mxu0
  %517 = vdwg.mxu0
  %v519 = vsel %vm60, %v136, 0
  %v522 = vsel %vm60, %v137, 0
  %524 = vmatprep.subr.mxu0 0.0
  %525 = vmatpush1.msra.mxu0 0.0
  %526 = vmatprep.subr.mxu0 0.0
  %527 = vmatpush1.msra.mxu0 0.0
  %528 = vmatprep.subr.mxu0 0.0
  %529 = vmatpush1.msra.mxu0 0.0
  %530 = vmatprep.subr.mxu0 0.0
  %531 = vmatpush1.msra.mxu0 0.0
  %532 = vmatprep.subr.mxu0 0.0
  %533 = vmatpush1.msra.mxu0 0.0
  %534 = vmatprep.subr.mxu0 0.0
  %535 = vmatpush1.msra.mxu0 0.0
  %536 = vmatprep.subr.mxu0 0.0
  %537 = vmatpush1.msra.mxu0 0.0
  %538 = vmatprep.subr.mxu0 0.0
  %539 = vmatpush1.msra.mxu0 0.0
  %540 = vmatprep.subr.mxu0 0.0
  %541 = vmatpush1.msra.mxu0 0.0
  %542 = vmatprep.subr.mxu0 0.0
  %543 = vmatpush1.msra.mxu0 0.0
  %544 = vmatprep.subr.mxu0 0.0
  %545 = vmatpush1.msra.mxu0 0.0
  %546 = vmatprep.subr.mxu0 0.0
  %547 = vmatpush1.msra.mxu0 0.0
  %548 = vmatprep.subr.mxu0 0.0
  %549 = vmatpush1.msra.mxu0 0.0
  %550 = vmatprep.subr.mxu0 0.0
  %551 = vmatpush1.msra.mxu0 0.0
  %552 = vmatprep.subr.mxu0 0.0
  %553 = vmatpush1.msra.mxu0 1.0
  %554 = vmatprep.subr.mxu0 0.0
  %555 = vmatpush1.msra.mxu0 1.0
  %556 = vmatprep.subr.mxu0 0.0
  %557 = vmatpush2.msra.mxu0 0.0
  %558 = vmatprep.subr.mxu0 0.0
  %559 = vmatpush2.msra.mxu0 0.0
  %560 = vmatprep.subr.mxu0 0.0
  %561 = vmatpush2.msra.mxu0 0.0
  %562 = vmatprep.subr.mxu0 0.0
  %563 = vmatpush2.msra.mxu0 0.0
  %564 = vmatprep.subr.mxu0 0.0
  %565 = vmatpush2.msra.mxu0 0.0
  %566 = vmatprep.subr.mxu0 0.0
  %567 = vmatpush2.msra.mxu0 0.0
  %568 = vmatprep.subr.mxu0 0.0
  %569 = vmatpush2.msra.mxu0 0.0
  %570 = vmatprep.subr.mxu0 0.0
  %571 = vmatpush2.msra.mxu0 0.0
  %572 = vmatprep.subr.mxu0 0.0
  %573 = vmatpush2.msra.mxu0 0.0
  %574 = vmatprep.subr.mxu0 0.0
  %575 = vmatpush2.msra.mxu0 0.0
  %576 = vmatprep.subr.mxu0 0.0
  %577 = vmatpush2.msra.mxu0 0.0
  %578 = vmatprep.subr.mxu0 0.0
  %579 = vmatpush2.msra.mxu0 0.0
  %580 = vmatprep.subr.mxu0 0.0
  %581 = vmatpush2.msra.mxu0 0.0
  %582 = vmatprep.subr.mxu0 0.0
  %583 = vmatpush2.msra.mxu0 0.0
  %584 = vmatprep.subr.mxu0 0.0
  %585 = vmatpush2.msra.mxu0 0.0
  %586 = vmatprep.subr.mxu0 0.0
  %587 = vmatpush2.msra.mxu0 0.0
  %588 = vmatprep.mubr.f32.mxu0 0.0
  %589 = vmatmul.mubr.f32.gmra.mxu0 %v519
  %v590 = vpop.f32.mrf.mxu0
  %v591 = vadd.f32 0.0, %v590
  %v592 = vpop.f32.mrf.mxu0
  %593 = vmatprep.mubr.f32.mxu0 0.0
  %594 = vmatmul.mubr.f32.gmra.mxu0 %v522
  %v595 = vpop.f32.mrf.mxu0
  %v596 = vadd.f32 0.0, %v595
  %v597 = vpop.f32.mrf.mxu0
  %598 = vdwg.mxu0
  %v599 = vadd.f32 %v131, %v353
  %v601 = vsel %vm60, %v58, 0
  %v604 = vsel %vm60, %v59, 0
  %606 = vmatprep.subr.mxu0 0.0
  %607 = vmatpush1.msra.mxu0 0.0
  %608 = vmatprep.subr.mxu0 0.0
  %609 = vmatpush1.msra.mxu0 0.0
  %610 = vmatprep.subr.mxu0 0.0
  %611 = vmatpush1.msra.mxu0 0.0
  %612 = vmatprep.subr.mxu0 0.0
  %613 = vmatpush1.msra.mxu0 0.0
  %614 = vmatprep.subr.mxu0 0.0
  %615 = vmatpush1.msra.mxu0 0.0
  %616 = vmatprep.subr.mxu0 0.0
  %617 = vmatpush1.msra.mxu0 0.0
  %618 = vmatprep.subr.mxu0 0.0
  %619 = vmatpush1.msra.mxu0 0.0
  %620 = vmatprep.subr.mxu0 0.0
  %621 = vmatpush1.msra.mxu0 0.0
  %622 = vmatprep.subr.mxu0 0.0
  %623 = vmatpush1.msra.mxu0 0.0
  %624 = vmatprep.subr.mxu0 0.0
  %625 = vmatpush1.msra.mxu0 0.0
  %626 = vmatprep.subr.mxu0 0.0
  %627 = vmatpush1.msra.mxu0 0.0
  %628 = vmatprep.subr.mxu0 0.0
  %629 = vmatpush1.msra.mxu0 0.0
  %630 = vmatprep.subr.mxu0 0.0
  %631 = vmatpush1.msra.mxu0 0.0
  %632 = vmatprep.subr.mxu0 0.0
  %633 = vmatpush1.msra.mxu0 0.0
  %634 = vmatprep.subr.mxu0 0.0
  %635 = vmatpush1.msra.mxu0 1.0
  %636 = vmatprep.subr.mxu0 0.0
  %637 = vmatpush1.msra.mxu0 1.0
  %638 = vmatprep.subr.mxu0 0.0
  %639 = vmatpush2.msra.mxu0 0.0
  %640 = vmatprep.subr.mxu0 0.0
  %641 = vmatpush2.msra.mxu0 0.0
  %642 = vmatprep.subr.mxu0 0.0
  %643 = vmatpush2.msra.mxu0 0.0
  %644 = vmatprep.subr.mxu0 0.0
  %645 = vmatpush2.msra.mxu0 0.0
  %646 = vmatprep.subr.mxu0 0.0
  %647 = vmatpush2.msra.mxu0 0.0
  %648 = vmatprep.subr.mxu0 0.0
  %649 = vmatpush2.msra.mxu0 0.0
  %650 = vmatprep.subr.mxu0 0.0
  %651 = vmatpush2.msra.mxu0 0.0
  %652 = vmatprep.subr.mxu0 0.0
  %653 = vmatpush2.msra.mxu0 0.0
  %654 = vmatprep.subr.mxu0 0.0
  %655 = vmatpush2.msra.mxu0 0.0
  %656 = vmatprep.subr.mxu0 0.0
  %657 = vmatpush2.msra.mxu0 0.0
  %658 = vmatprep.subr.mxu0 0.0
  %659 = vmatpush2.msra.mxu0 0.0
  %660 = vmatprep.subr.mxu0 0.0
  %661 = vmatpush2.msra.mxu0 0.0
  %662 = vmatprep.subr.mxu0 0.0
  %663 = vmatpush2.msra.mxu0 0.0
  %664 = vmatprep.subr.mxu0 0.0
  %665 = vmatpush2.msra.mxu0 0.0
  %666 = vmatprep.subr.mxu0 0.0
  %667 = vmatpush2.msra.mxu0 0.0
  %668 = vmatprep.subr.mxu0 0.0
  %669 = vmatpush2.msra.mxu0 0.0
  %670 = vmatprep.mubr.f32.mxu0 0.0
  %671 = vmatmul.mubr.f32.gmra.mxu0 %v601
  %v672 = vpop.f32.mrf.mxu0
  %v673 = vadd.f32 %v591, %v672
  %v674 = vpop.f32.mrf.mxu0
  %675 = vmatprep.mubr.f32.mxu0 0.0
  %676 = vmatmul.mubr.f32.gmra.mxu0 %v604
  %v677 = vpop.f32.mrf.mxu0
  %v678 = vadd.f32 %v596, %v677
  %v679 = vpop.f32.mrf.mxu0
  %680 = vdwg.mxu0
  %v681 = vadd.f32 %v205, %v279
  %v682 = vadd.f32 %v429, %v510
  %v683 = vadd.f32 %v434, %v515
  %685 = vset.pattern.permute.xlu0 0
  %686 = vperm.xlu0 %685, %v429
  %v687 = vpop.permute.xlu0 %686
  %690 = vset.pattern.permute.xlu0 0
  %691 = vperm.xlu0 %690, %v434
  %v692 = vpop.permute.xlu0 %691
  %v694 = vlaneseq
  %v695 = vshrl.u32 %v694, 7
  %v696 = vsub.s32 0, %v695
  %v697 = vrot.slane %v205, %v696
  %vm698 = vcmp.eq.f32.partialorder %v687, %v697
  %vm699 = vcmp.eq.f32.partialorder %v692, %v697
  %vm700 = vmand %vm38, %vm698
  %vm701 = vmand %vm39, %vm699
  %v702 = vsel %vm700, 1, 0
  %v703 = vsel %vm701, 1, 0
  %v704 = vcvt.s32.f32 %v702
  %v705 = vcvt.s32.f32 %v703
  %706 = vmatprep.subr.mxu0 0.0
  %707 = vmatpush1.msra.mxu0 0.0
  %708 = vmatprep.subr.mxu0 0.0
  %709 = vmatpush1.msra.mxu0 0.0
  %710 = vmatprep.subr.mxu0 0.0
  %711 = vmatpush1.msra.mxu0 0.0
  %712 = vmatprep.subr.mxu0 0.0
  %713 = vmatpush1.msra.mxu0 0.0
  %714 = vmatprep.subr.mxu0 0.0
  %715 = vmatpush1.msra.mxu0 0.0
  %716 = vmatprep.subr.mxu0 0.0
  %717 = vmatpush1.msra.mxu0 0.0
  %718 = vmatprep.subr.mxu0 0.0
  %719 = vmatpush1.msra.mxu0 0.0
  %720 = vmatprep.subr.mxu0 0.0
  %721 = vmatpush1.msra.mxu0 0.0
  %722 = vmatprep.subr.mxu0 0.0
  %723 = vmatpush1.msra.mxu0 0.0
  %724 = vmatprep.subr.mxu0 0.0
  %725 = vmatpush1.msra.mxu0 0.0
  %726 = vmatprep.subr.mxu0 0.0
  %727 = vmatpush1.msra.mxu0 0.0
  %728 = vmatprep.subr.mxu0 0.0
  %729 = vmatpush1.msra.mxu0 0.0
  %730 = vmatprep.subr.mxu0 0.0
  %731 = vmatpush1.msra.mxu0 0.0
  %732 = vmatprep.subr.mxu0 0.0
  %733 = vmatpush1.msra.mxu0 0.0
  %734 = vmatprep.subr.mxu0 0.0
  %735 = vmatpush1.msra.mxu0 %v705
  %736 = vmatprep.subr.mxu0 0.0
  %737 = vmatpush1.msra.mxu0 %v704
  %738 = vmatprep.subr.mxu0 0.0
  %739 = vmatpush2.msra.mxu0 0.0
  %740 = vmatprep.subr.mxu0 0.0
  %741 = vmatpush2.msra.mxu0 0.0
  %742 = vmatprep.subr.mxu0 0.0
  %743 = vmatpush2.msra.mxu0 0.0
  %744 = vmatprep.subr.mxu0 0.0
  %745 = vmatpush2.msra.mxu0 0.0
  %746 = vmatprep.subr.mxu0 0.0
  %747 = vmatpush2.msra.mxu0 0.0
  %748 = vmatprep.subr.mxu0 0.0
  %749 = vmatpush2.msra.mxu0 0.0
  %750 = vmatprep.subr.mxu0 0.0
  %751 = vmatpush2.msra.mxu0 0.0
  %752 = vmatprep.subr.mxu0 0.0
  %753 = vmatpush2.msra.mxu0 0.0
  %754 = vmatprep.subr.mxu0 0.0
  %755 = vmatpush2.msra.mxu0 0.0
  %756 = vmatprep.subr.mxu0 0.0
  %757 = vmatpush2.msra.mxu0 0.0
  %758 = vmatprep.subr.mxu0 0.0
  %759 = vmatpush2.msra.mxu0 0.0
  %760 = vmatprep.subr.mxu0 0.0
  %761 = vmatpush2.msra.mxu0 0.0
  %762 = vmatprep.subr.mxu0 0.0
  %763 = vmatpush2.msra.mxu0 0.0
  %764 = vmatprep.subr.mxu0 0.0
  %765 = vmatpush2.msra.mxu0 0.0
  %766 = vmatprep.subr.mxu0 0.0
  %767 = vmatpush2.msra.mxu0 0.0
  %768 = vmatprep.subr.mxu0 0.0
  %769 = vmatpush2.msra.mxu0 0.0
  %770 = vmatprep.mubr.f32.mxu0 0.0
  %771 = vmatmul.mubr.f32.gmra.mxu0 %v62
  %v772 = vpop.f32.mrf.mxu0
  %v773 = vadd.f32 0.0, %v772
  %v774 = vpop.f32.mrf.mxu0
  %775 = vdwg.mxu0
  %777 = vset.pattern.permute.xlu0 0
  %778 = vperm.xlu0 %777, %v591
  %v779 = vpop.permute.xlu0 %778
  %782 = vset.pattern.permute.xlu0 0
  %783 = vperm.xlu0 %782, %v596
  %v784 = vpop.permute.xlu0 %783
  %v786 = vlaneseq
  %v787 = vshrl.u32 %v786, 7
  %v788 = vsub.s32 0, %v787
  %v789 = vrot.slane %v353, %v788
  %vm790 = vcmp.eq.f32.partialorder %v779, %v789
  %vm791 = vcmp.eq.f32.partialorder %v784, %v789
  %vm792 = vmand %vm50, %vm790
  %vm793 = vmand %vm51, %vm791
  %v794 = vsel %vm792, 1, 0
  %v795 = vsel %vm793, 1, 0
  %v796 = vcvt.s32.f32 %v794
  %v797 = vcvt.s32.f32 %v795
  %798 = vmatprep.subr.mxu0 0.0
  %799 = vmatpush1.msra.mxu0 0.0
  %800 = vmatprep.subr.mxu0 0.0
  %801 = vmatpush1.msra.mxu0 0.0
  %802 = vmatprep.subr.mxu0 0.0
  %803 = vmatpush1.msra.mxu0 0.0
  %804 = vmatprep.subr.mxu0 0.0
  %805 = vmatpush1.msra.mxu0 0.0
  %806 = vmatprep.subr.mxu0 0.0
  %807 = vmatpush1.msra.mxu0 0.0
  %808 = vmatprep.subr.mxu0 0.0
  %809 = vmatpush1.msra.mxu0 0.0
  %810 = vmatprep.subr.mxu0 0.0
  %811 = vmatpush1.msra.mxu0 0.0
  %812 = vmatprep.subr.mxu0 0.0
  %813 = vmatpush1.msra.mxu0 0.0
  %814 = vmatprep.subr.mxu0 0.0
  %815 = vmatpush1.msra.mxu0 0.0
  %816 = vmatprep.subr.mxu0 0.0
  %817 = vmatpush1.msra.mxu0 0.0
  %818 = vmatprep.subr.mxu0 0.0
  %819 = vmatpush1.msra.mxu0 0.0
  %820 = vmatprep.subr.mxu0 0.0
  %821 = vmatpush1.msra.mxu0 0.0
  %822 = vmatprep.subr.mxu0 0.0
  %823 = vmatpush1.msra.mxu0 0.0
  %824 = vmatprep.subr.mxu0 0.0
  %825 = vmatpush1.msra.mxu0 0.0
  %826 = vmatprep.subr.mxu0 0.0
  %827 = vmatpush1.msra.mxu0 %v797
  %828 = vmatprep.subr.mxu0 0.0
  %829 = vmatpush1.msra.mxu0 %v796
  %830 = vmatprep.subr.mxu0 0.0
  %831 = vmatpush2.msra.mxu0 0.0
  %832 = vmatprep.subr.mxu0 0.0
  %833 = vmatpush2.msra.mxu0 0.0
  %834 = vmatprep.subr.mxu0 0.0
  %835 = vmatpush2.msra.mxu0 0.0
  %836 = vmatprep.subr.mxu0 0.0
  %837 = vmatpush2.msra.mxu0 0.0
  %838 = vmatprep.subr.mxu0 0.0
  %839 = vmatpush2.msra.mxu0 0.0
  %840 = vmatprep.subr.mxu0 0.0
  %841 = vmatpush2.msra.mxu0 0.0
  %842 = vmatprep.subr.mxu0 0.0
  %843 = vmatpush2.msra.mxu0 0.0
  %844 = vmatprep.subr.mxu0 0.0
  %845 = vmatpush2.msra.mxu0 0.0
  %846 = vmatprep.subr.mxu0 0.0
  %847 = vmatpush2.msra.mxu0 0.0
  %848 = vmatprep.subr.mxu0 0.0
  %849 = vmatpush2.msra.mxu0 0.0
  %850 = vmatprep.subr.mxu0 0.0
  %851 = vmatpush2.msra.mxu0 0.0
  %852 = vmatprep.subr.mxu0 0.0
  %853 = vmatpush2.msra.mxu0 0.0
  %854 = vmatprep.subr.mxu0 0.0
  %855 = vmatpush2.msra.mxu0 0.0
  %856 = vmatprep.subr.mxu0 0.0
  %857 = vmatpush2.msra.mxu0 0.0
  %858 = vmatprep.subr.mxu0 0.0
  %859 = vmatpush2.msra.mxu0 0.0
  %860 = vmatprep.subr.mxu0 0.0
  %861 = vmatpush2.msra.mxu0 0.0
  %862 = vmatprep.mubr.f32.mxu0 0.0
  %863 = vmatmul.mubr.f32.gmra.mxu0 %v62
  %v864 = vpop.f32.mrf.mxu0
  %v865 = vadd.f32 0.0, %v864
  %v866 = vpop.f32.mrf.mxu0
  %867 = vdwg.mxu0
  %869 = vset.pattern.permute.xlu0 0
  %870 = vperm.xlu0 %869, %v673
  %v871 = vpop.permute.xlu0 %870
  %874 = vset.pattern.permute.xlu0 0
  %875 = vperm.xlu0 %874, %v678
  %v876 = vpop.permute.xlu0 %875
  %v878 = vlaneseq
  %v879 = vshrl.u32 %v878, 7
  %v880 = vsub.s32 0, %v879
  %v881 = vrot.slane %v599, %v880
  %vm882 = vcmp.eq.f32.partialorder %v871, %v881
  %vm883 = vcmp.eq.f32.partialorder %v876, %v881
  %vm884 = vmand %vm50, %vm882
  %vm885 = vmand %vm51, %vm883
  %v886 = vsel %vm884, 1, 0
  %v887 = vsel %vm885, 1, 0
  %v888 = vcvt.s32.f32 %v886
  %v889 = vcvt.s32.f32 %v887
  %891 = vset.pattern.permute.xlu0 0
  %892 = vperm.xlu0 %891, %v682
  %v893 = vpop.permute.xlu0 %892
  %896 = vset.pattern.permute.xlu0 0
  %897 = vperm.xlu0 %896, %v683
  %v898 = vpop.permute.xlu0 %897
  %vm900 = vcmp.eq.f32.partialorder %v893, %v881
  %vm901 = vcmp.eq.f32.partialorder %v898, %v881
  %vm902 = vmand %vm52, %vm900
  %vm903 = vmand %vm53, %vm901
  %v904 = vsel %vm902, 1, 0
  %v905 = vsel %vm903, 1, 0
  %v906 = vcvt.s32.f32 %v904
  %v907 = vcvt.s32.f32 %v905
  %908 = vmatprep.subr.mxu0 0.0
  %909 = vmatpush1.msra.mxu0 0.0
  %910 = vmatprep.subr.mxu0 0.0
  %911 = vmatpush1.msra.mxu0 0.0
  %912 = vmatprep.subr.mxu0 0.0
  %913 = vmatpush1.msra.mxu0 0.0
  %914 = vmatprep.subr.mxu0 0.0
  %915 = vmatpush1.msra.mxu0 0.0
  %916 = vmatprep.subr.mxu0 0.0
  %917 = vmatpush1.msra.mxu0 0.0
  %918 = vmatprep.subr.mxu0 0.0
  %919 = vmatpush1.msra.mxu0 0.0
  %920 = vmatprep.subr.mxu0 0.0
  %921 = vmatpush1.msra.mxu0 0.0
  %922 = vmatprep.subr.mxu0 0.0
  %923 = vmatpush1.msra.mxu0 0.0
  %924 = vmatprep.subr.mxu0 0.0
  %925 = vmatpush1.msra.mxu0 0.0
  %926 = vmatprep.subr.mxu0 0.0
  %927 = vmatpush1.msra.mxu0 0.0
  %928 = vmatprep.subr.mxu0 0.0
  %929 = vmatpush1.msra.mxu0 0.0
  %930 = vmatprep.subr.mxu0 0.0
  %931 = vmatpush1.msra.mxu0 0.0
  %932 = vmatprep.subr.mxu0 0.0
  %933 = vmatpush1.msra.mxu0 0.0
  %934 = vmatprep.subr.mxu0 0.0
  %935 = vmatpush1.msra.mxu0 0.0
  %936 = vmatprep.subr.mxu0 0.0
  %937 = vmatpush1.msra.mxu0 %v907
  %938 = vmatprep.subr.mxu0 0.0
  %939 = vmatpush1.msra.mxu0 %v906
  %940 = vmatprep.subr.mxu0 0.0
  %941 = vmatpush2.msra.mxu0 0.0
  %942 = vmatprep.subr.mxu0 0.0
  %943 = vmatpush2.msra.mxu0 0.0
  %944 = vmatprep.subr.mxu0 0.0
  %945 = vmatpush2.msra.mxu0 0.0
  %946 = vmatprep.subr.mxu0 0.0
  %947 = vmatpush2.msra.mxu0 0.0
  %948 = vmatprep.subr.mxu0 0.0
  %949 = vmatpush2.msra.mxu0 0.0
  %950 = vmatprep.subr.mxu0 0.0
  %951 = vmatpush2.msra.mxu0 0.0
  %952 = vmatprep.subr.mxu0 0.0
  %953 = vmatpush2.msra.mxu0 0.0
  %954 = vmatprep.subr.mxu0 0.0
  %955 = vmatpush2.msra.mxu0 0.0
  %956 = vmatprep.subr.mxu0 0.0
  %957 = vmatpush2.msra.mxu0 0.0
  %958 = vmatprep.subr.mxu0 0.0
  %959 = vmatpush2.msra.mxu0 0.0
  %960 = vmatprep.subr.mxu0 0.0
  %961 = vmatpush2.msra.mxu0 0.0
  %962 = vmatprep.subr.mxu0 0.0
  %963 = vmatpush2.msra.mxu0 0.0
  %964 = vmatprep.subr.mxu0 0.0
  %965 = vmatpush2.msra.mxu0 0.0
  %966 = vmatprep.subr.mxu0 0.0
  %967 = vmatpush2.msra.mxu0 0.0
  %968 = vmatprep.subr.mxu0 0.0
  %969 = vmatpush2.msra.mxu0 0.0
  %970 = vmatprep.subr.mxu0 0.0
  %971 = vmatpush2.msra.mxu0 0.0
  %972 = vmatprep.mubr.f32.mxu0 0.0
  %973 = vmatmul.mubr.f32.gmra.mxu0 %v62
  %v974 = vpop.f32.mrf.mxu0
  %v975 = vadd.f32 0.0, %v974
  %v976 = vpop.f32.mrf.mxu0
  %977 = vdwg.mxu0
  %978 = vmatprep.subr.mxu0 0.0
  %979 = vmatpush1.msra.mxu0 0.0
  %980 = vmatprep.subr.mxu0 0.0
  %981 = vmatpush1.msra.mxu0 0.0
  %982 = vmatprep.subr.mxu0 0.0
  %983 = vmatpush1.msra.mxu0 0.0
  %984 = vmatprep.subr.mxu0 0.0
  %985 = vmatpush1.msra.mxu0 0.0
  %986 = vmatprep.subr.mxu0 0.0
  %987 = vmatpush1.msra.mxu0 0.0
  %988 = vmatprep.subr.mxu0 0.0
  %989 = vmatpush1.msra.mxu0 0.0
  %990 = vmatprep.subr.mxu0 0.0
  %991 = vmatpush1.msra.mxu0 0.0
  %992 = vmatprep.subr.mxu0 0.0
  %993 = vmatpush1.msra.mxu0 0.0
  %994 = vmatprep.subr.mxu0 0.0
  %995 = vmatpush1.msra.mxu0 0.0
  %996 = vmatprep.subr.mxu0 0.0
  %997 = vmatpush1.msra.mxu0 0.0
  %998 = vmatprep.subr.mxu0 0.0
  %999 = vmatpush1.msra.mxu0 0.0
  %1000 = vmatprep.subr.mxu0 0.0
  %1001 = vmatpush1.msra.mxu0 0.0
  %1002 = vmatprep.subr.mxu0 0.0
  %1003 = vmatpush1.msra.mxu0 0.0
  %1004 = vmatprep.subr.mxu0 0.0
  %1005 = vmatpush1.msra.mxu0 0.0
  %1006 = vmatprep.subr.mxu0 0.0
  %1007 = vmatpush1.msra.mxu0 %v889
  %1008 = vmatprep.subr.mxu0 0.0
  %1009 = vmatpush1.msra.mxu0 %v888
  %1010 = vmatprep.subr.mxu0 0.0
  %1011 = vmatpush2.msra.mxu0 0.0
  %1012 = vmatprep.subr.mxu0 0.0
  %1013 = vmatpush2.msra.mxu0 0.0
  %1014 = vmatprep.subr.mxu0 0.0
  %1015 = vmatpush2.msra.mxu0 0.0
  %1016 = vmatprep.subr.mxu0 0.0
  %1017 = vmatpush2.msra.mxu0 0.0
  %1018 = vmatprep.subr.mxu0 0.0
  %1019 = vmatpush2.msra.mxu0 0.0
  %1020 = vmatprep.subr.mxu0 0.0
  %1021 = vmatpush2.msra.mxu0 0.0
  %1022 = vmatprep.subr.mxu0 0.0
  %1023 = vmatpush2.msra.mxu0 0.0
  %1024 = vmatprep.subr.mxu0 0.0
  %1025 = vmatpush2.msra.mxu0 0.0
  %1026 = vmatprep.subr.mxu0 0.0
  %1027 = vmatpush2.msra.mxu0 0.0
  %1028 = vmatprep.subr.mxu0 0.0
  %1029 = vmatpush2.msra.mxu0 0.0
  %1030 = vmatprep.subr.mxu0 0.0
  %1031 = vmatpush2.msra.mxu0 0.0
  %1032 = vmatprep.subr.mxu0 0.0
  %1033 = vmatpush2.msra.mxu0 0.0
  %1034 = vmatprep.subr.mxu0 0.0
  %1035 = vmatpush2.msra.mxu0 0.0
  %1036 = vmatprep.subr.mxu0 0.0
  %1037 = vmatpush2.msra.mxu0 0.0
  %1038 = vmatprep.subr.mxu0 0.0
  %1039 = vmatpush2.msra.mxu0 0.0
  %1040 = vmatprep.subr.mxu0 0.0
  %1041 = vmatpush2.msra.mxu0 0.0
  %1042 = vmatprep.mubr.f32.mxu0 0.0
  %1043 = vmatmul.mubr.f32.gmra.mxu0 %v62
  %v1044 = vpop.f32.mrf.mxu0
  %v1045 = vadd.f32 %v975, %v1044
  %v1046 = vpop.f32.mrf.mxu0
  %1047 = vdwg.mxu0
  %v1048 = vlaneseq
  %v1049 = vshrl.u32 %v1048, 7
  %v1050 = vsub.s32 0, %v1049
  %v1051 = vrot.slane %v681, %v1050
  %vm1052 = vcmp.eq.f32.partialorder %v871, %v1051
  %vm1053 = vcmp.eq.f32.partialorder %v876, %v1051
  %vm1054 = vmand %vm54, %vm1052
  %vm1055 = vmand %vm55, %vm1053
  %v1056 = vsel %vm1054, 1, 0
  %v1057 = vsel %vm1055, 1, 0
  %v1058 = vcvt.s32.f32 %v1056
  %v1059 = vcvt.s32.f32 %v1057
  %vm1060 = vcmp.eq.f32.partialorder %v893, %v1051
  %vm1061 = vcmp.eq.f32.partialorder %v898, %v1051
  %vm1062 = vmand %vm38, %vm1060
  %vm1063 = vmand %vm39, %vm1061
  %v1064 = vsel %vm1062, 1, 0
  %v1065 = vsel %vm1063, 1, 0
  %v1066 = vcvt.s32.f32 %v1064
  %v1067 = vcvt.s32.f32 %v1065
  %1068 = vmatprep.subr.mxu0 0.0
  %1069 = vmatpush1.msra.mxu0 0.0
  %1070 = vmatprep.subr.mxu0 0.0
  %1071 = vmatpush1.msra.mxu0 0.0
  %1072 = vmatprep.subr.mxu0 0.0
  %1073 = vmatpush1.msra.mxu0 0.0
  %1074 = vmatprep.subr.mxu0 0.0
  %1075 = vmatpush1.msra.mxu0 0.0
  %1076 = vmatprep.subr.mxu0 0.0
  %1077 = vmatpush1.msra.mxu0 0.0
  %1078 = vmatprep.subr.mxu0 0.0
  %1079 = vmatpush1.msra.mxu0 0.0
  %1080 = vmatprep.subr.mxu0 0.0
  %1081 = vmatpush1.msra.mxu0 0.0
  %1082 = vmatprep.subr.mxu0 0.0
  %1083 = vmatpush1.msra.mxu0 0.0
  %1084 = vmatprep.subr.mxu0 0.0
  %1085 = vmatpush1.msra.mxu0 0.0
  %1086 = vmatprep.subr.mxu0 0.0
  %1087 = vmatpush1.msra.mxu0 0.0
  %1088 = vmatprep.subr.mxu0 0.0
  %1089 = vmatpush1.msra.mxu0 0.0
  %1090 = vmatprep.subr.mxu0 0.0
  %1091 = vmatpush1.msra.mxu0 0.0
  %1092 = vmatprep.subr.mxu0 0.0
  %1093 = vmatpush1.msra.mxu0 0.0
  %1094 = vmatprep.subr.mxu0 0.0
  %1095 = vmatpush1.msra.mxu0 0.0
  %1096 = vmatprep.subr.mxu0 0.0
  %1097 = vmatpush1.msra.mxu0 %v1067
  %1098 = vmatprep.subr.mxu0 0.0
  %1099 = vmatpush1.msra.mxu0 %v1066
  %1100 = vmatprep.subr.mxu0 0.0
  %1101 = vmatpush2.msra.mxu0 0.0
  %1102 = vmatprep.subr.mxu0 0.0
  %1103 = vmatpush2.msra.mxu0 0.0
  %1104 = vmatprep.subr.mxu0 0.0
  %1105 = vmatpush2.msra.mxu0 0.0
  %1106 = vmatprep.subr.mxu0 0.0
  %1107 = vmatpush2.msra.mxu0 0.0
  %1108 = vmatprep.subr.mxu0 0.0
  %1109 = vmatpush2.msra.mxu0 0.0
  %1110 = vmatprep.subr.mxu0 0.0
  %1111 = vmatpush2.msra.mxu0 0.0
  %1112 = vmatprep.subr.mxu0 0.0
  %1113 = vmatpush2.msra.mxu0 0.0
  %1114 = vmatprep.subr.mxu0 0.0
  %1115 = vmatpush2.msra.mxu0 0.0
  %1116 = vmatprep.subr.mxu0 0.0
  %1117 = vmatpush2.msra.mxu0 0.0
  %1118 = vmatprep.subr.mxu0 0.0
  %1119 = vmatpush2.msra.mxu0 0.0
  %1120 = vmatprep.subr.mxu0 0.0
  %1121 = vmatpush2.msra.mxu0 0.0
  %1122 = vmatprep.subr.mxu0 0.0
  %1123 = vmatpush2.msra.mxu0 0.0
  %1124 = vmatprep.subr.mxu0 0.0
  %1125 = vmatpush2.msra.mxu0 0.0
  %1126 = vmatprep.subr.mxu0 0.0
  %1127 = vmatpush2.msra.mxu0 0.0
  %1128 = vmatprep.subr.mxu0 0.0
  %1129 = vmatpush2.msra.mxu0 0.0
  %1130 = vmatprep.subr.mxu0 0.0
  %1131 = vmatpush2.msra.mxu0 0.0
  %1132 = vmatprep.mubr.f32.mxu0 0.0
  %1133 = vmatmul.mubr.f32.gmra.mxu0 %v62
  %v1134 = vpop.f32.mrf.mxu0
  %v1135 = vadd.f32 0.0, %v1134
  %v1136 = vpop.f32.mrf.mxu0
  %1137 = vdwg.mxu0
  %1138 = vmatprep.subr.mxu0 0.0
  %1139 = vmatpush1.msra.mxu0 0.0
  %1140 = vmatprep.subr.mxu0 0.0
  %1141 = vmatpush1.msra.mxu0 0.0
  %1142 = vmatprep.subr.mxu0 0.0
  %1143 = vmatpush1.msra.mxu0 0.0
  %1144 = vmatprep.subr.mxu0 0.0
  %1145 = vmatpush1.msra.mxu0 0.0
  %1146 = vmatprep.subr.mxu0 0.0
  %1147 = vmatpush1.msra.mxu0 0.0
  %1148 = vmatprep.subr.mxu0 0.0
  %1149 = vmatpush1.msra.mxu0 0.0
  %1150 = vmatprep.subr.mxu0 0.0
  %1151 = vmatpush1.msra.mxu0 0.0
  %1152 = vmatprep.subr.mxu0 0.0
  %1153 = vmatpush1.msra.mxu0 0.0
  %1154 = vmatprep.subr.mxu0 0.0
  %1155 = vmatpush1.msra.mxu0 0.0
  %1156 = vmatprep.subr.mxu0 0.0
  %1157 = vmatpush1.msra.mxu0 0.0
  %1158 = vmatprep.subr.mxu0 0.0
  %1159 = vmatpush1.msra.mxu0 0.0
  %1160 = vmatprep.subr.mxu0 0.0
  %1161 = vmatpush1.msra.mxu0 0.0
  %1162 = vmatprep.subr.mxu0 0.0
  %1163 = vmatpush1.msra.mxu0 0.0
  %1164 = vmatprep.subr.mxu0 0.0
  %1165 = vmatpush1.msra.mxu0 0.0
  %1166 = vmatprep.subr.mxu0 0.0
  %1167 = vmatpush1.msra.mxu0 %v1059
  %1168 = vmatprep.subr.mxu0 0.0
  %1169 = vmatpush1.msra.mxu0 %v1058
  %1170 = vmatprep.subr.mxu0 0.0
  %1171 = vmatpush2.msra.mxu0 0.0
  %1172 = vmatprep.subr.mxu0 0.0
  %1173 = vmatpush2.msra.mxu0 0.0
  %1174 = vmatprep.subr.mxu0 0.0
  %1175 = vmatpush2.msra.mxu0 0.0
  %1176 = vmatprep.subr.mxu0 0.0
  %1177 = vmatpush2.msra.mxu0 0.0
  %1178 = vmatprep.subr.mxu0 0.0
  %1179 = vmatpush2.msra.mxu0 0.0
  %1180 = vmatprep.subr.mxu0 0.0
  %1181 = vmatpush2.msra.mxu0 0.0
  %1182 = vmatprep.subr.mxu0 0.0
  %1183 = vmatpush2.msra.mxu0 0.0
  %1184 = vmatprep.subr.mxu0 0.0
  %1185 = vmatpush2.msra.mxu0 0.0
  %1186 = vmatprep.subr.mxu0 0.0
  %1187 = vmatpush2.msra.mxu0 0.0
  %1188 = vmatprep.subr.mxu0 0.0
  %1189 = vmatpush2.msra.mxu0 0.0
  %1190 = vmatprep.subr.mxu0 0.0
  %1191 = vmatpush2.msra.mxu0 0.0
  %1192 = vmatprep.subr.mxu0 0.0
  %1193 = vmatpush2.msra.mxu0 0.0
  %1194 = vmatprep.subr.mxu0 0.0
  %1195 = vmatpush2.msra.mxu0 0.0
  %1196 = vmatprep.subr.mxu0 0.0
  %1197 = vmatpush2.msra.mxu0 0.0
  %1198 = vmatprep.subr.mxu0 0.0
  %1199 = vmatpush2.msra.mxu0 0.0
  %1200 = vmatprep.subr.mxu0 0.0
  %1201 = vmatpush2.msra.mxu0 0.0
  %1202 = vmatprep.mubr.f32.mxu0 0.0
  %1203 = vmatmul.mubr.f32.gmra.mxu0 %v62
  %v1204 = vpop.f32.mrf.mxu0
  %v1205 = vadd.f32 %v1135, %v1204
  %v1206 = vpop.f32.mrf.mxu0
  %1207 = vdwg.mxu0
  %1209 = vset.pattern.permute.xlu0 0
  %1210 = vperm.xlu0 %1209, %v26
  %v1211 = vpop.permute.xlu0 %1210
  %1214 = vset.pattern.permute.xlu0 0
  %1215 = vperm.xlu0 %1214, %v27
  %v1216 = vpop.permute.xlu0 %1215
  %v1219 = vlaneseq
  %v1220 = vshrl.u32 %v1219, 7
  %v1221 = vsub.s32 0, %v1220
  %v1222 = vrot.slane %v24, %v1221
  %vm1224 = vcmp.eq.f32.partialorder %v1211, %v1222
  %vm1225 = vcmp.eq.f32.partialorder %v1216, %v1222
  %vm1226 = vmand %vm38, %vm1224
  %vm1227 = vmand %vm39, %vm1225
  %v1228 = vsel %vm1226, 1, 0
  %v1229 = vsel %vm1227, 1, 0
  %v1230 = vcvt.s32.f32 %v1228
  %v1231 = vcvt.s32.f32 %v1229
  %1232 = vmatprep.subr.mxu0 0.0
  %1233 = vmatpush1.msra.mxu0 0.0
  %1234 = vmatprep.subr.mxu0 0.0
  %1235 = vmatpush1.msra.mxu0 0.0
  %1236 = vmatprep.subr.mxu0 0.0
  %1237 = vmatpush1.msra.mxu0 0.0
  %1238 = vmatprep.subr.mxu0 0.0
  %1239 = vmatpush1.msra.mxu0 0.0
  %1240 = vmatprep.subr.mxu0 0.0
  %1241 = vmatpush1.msra.mxu0 0.0
  %1242 = vmatprep.subr.mxu0 0.0
  %1243 = vmatpush1.msra.mxu0 0.0
  %1244 = vmatprep.subr.mxu0 0.0
  %1245 = vmatpush1.msra.mxu0 0.0
  %1246 = vmatprep.subr.mxu0 0.0
  %1247 = vmatpush1.msra.mxu0 0.0
  %1248 = vmatprep.subr.mxu0 0.0
  %1249 = vmatpush1.msra.mxu0 0.0
  %1250 = vmatprep.subr.mxu0 0.0
  %1251 = vmatpush1.msra.mxu0 0.0
  %1252 = vmatprep.subr.mxu0 0.0
  %1253 = vmatpush1.msra.mxu0 0.0
  %1254 = vmatprep.subr.mxu0 0.0
  %1255 = vmatpush1.msra.mxu0 0.0
  %1256 = vmatprep.subr.mxu0 0.0
  %1257 = vmatpush1.msra.mxu0 0.0
  %1258 = vmatprep.subr.mxu0 0.0
  %1259 = vmatpush1.msra.mxu0 0.0
  %1260 = vmatprep.subr.mxu0 0.0
  %1261 = vmatpush1.msra.mxu0 %v1231
  %1262 = vmatprep.subr.mxu0 0.0
  %1263 = vmatpush1.msra.mxu0 %v1230
  %1264 = vmatprep.subr.mxu0 0.0
  %1265 = vmatpush2.msra.mxu0 0.0
  %1266 = vmatprep.subr.mxu0 0.0
  %1267 = vmatpush2.msra.mxu0 0.0
  %1268 = vmatprep.subr.mxu0 0.0
  %1269 = vmatpush2.msra.mxu0 0.0
  %1270 = vmatprep.subr.mxu0 0.0
  %1271 = vmatpush2.msra.mxu0 0.0
  %1272 = vmatprep.subr.mxu0 0.0
  %1273 = vmatpush2.msra.mxu0 0.0
  %1274 = vmatprep.subr.mxu0 0.0
  %1275 = vmatpush2.msra.mxu0 0.0
  %1276 = vmatprep.subr.mxu0 0.0
  %1277 = vmatpush2.msra.mxu0 0.0
  %1278 = vmatprep.subr.mxu0 0.0
  %1279 = vmatpush2.msra.mxu0 0.0
  %1280 = vmatprep.subr.mxu0 0.0
  %1281 = vmatpush2.msra.mxu0 0.0
  %1282 = vmatprep.subr.mxu0 0.0
  %1283 = vmatpush2.msra.mxu0 0.0
  %1284 = vmatprep.subr.mxu0 0.0
  %1285 = vmatpush2.msra.mxu0 0.0
  %1286 = vmatprep.subr.mxu0 0.0
  %1287 = vmatpush2.msra.mxu0 0.0
  %1288 = vmatprep.subr.mxu0 0.0
  %1289 = vmatpush2.msra.mxu0 0.0
  %1290 = vmatprep.subr.mxu0 0.0
  %1291 = vmatpush2.msra.mxu0 0.0
  %1292 = vmatprep.subr.mxu0 0.0
  %1293 = vmatpush2.msra.mxu0 0.0
  %1294 = vmatprep.subr.mxu0 0.0
  %1295 = vmatpush2.msra.mxu0 0.0
  %1296 = vmatprep.mubr.f32.mxu0 0.0
  %1297 = vmatmul.mubr.f32.gmra.mxu0 %v62
  %v1298 = vpop.f32.mrf.mxu0
  %v1299 = vadd.f32 0.0, %v1298
  %v1300 = vpop.f32.mrf.mxu0
  %1301 = vdwg.mxu0
  %vm1302 = vmand %vm50, %vm1224
  %vm1303 = vmand %vm51, %vm1225
  %v1304 = vsel %vm1302, 1, 0
  %v1305 = vsel %vm1303, 1, 0
  %v1306 = vcvt.s32.f32 %v1304
  %v1307 = vcvt.s32.f32 %v1305
  %1308 = vmatprep.subr.mxu0 0.0
  %1309 = vmatpush1.msra.mxu0 0.0
  %1310 = vmatprep.subr.mxu0 0.0
  %1311 = vmatpush1.msra.mxu0 0.0
  %1312 = vmatprep.subr.mxu0 0.0
  %1313 = vmatpush1.msra.mxu0 0.0
  %1314 = vmatprep.subr.mxu0 0.0
  %1315 = vmatpush1.msra.mxu0 0.0
  %1316 = vmatprep.subr.mxu0 0.0
  %1317 = vmatpush1.msra.mxu0 0.0
  %1318 = vmatprep.subr.mxu0 0.0
  %1319 = vmatpush1.msra.mxu0 0.0
  %1320 = vmatprep.subr.mxu0 0.0
  %1321 = vmatpush1.msra.mxu0 0.0
  %1322 = vmatprep.subr.mxu0 0.0
  %1323 = vmatpush1.msra.mxu0 0.0
  %1324 = vmatprep.subr.mxu0 0.0
  %1325 = vmatpush1.msra.mxu0 0.0
  %1326 = vmatprep.subr.mxu0 0.0
  %1327 = vmatpush1.msra.mxu0 0.0
  %1328 = vmatprep.subr.mxu0 0.0
  %1329 = vmatpush1.msra.mxu0 0.0
  %1330 = vmatprep.subr.mxu0 0.0
  %1331 = vmatpush1.msra.mxu0 0.0
  %1332 = vmatprep.subr.mxu0 0.0
  %1333 = vmatpush1.msra.mxu0 0.0
  %1334 = vmatprep.subr.mxu0 0.0
  %1335 = vmatpush1.msra.mxu0 0.0
  %1336 = vmatprep.subr.mxu0 0.0
  %1337 = vmatpush1.msra.mxu0 %v1307
  %1338 = vmatprep.subr.mxu0 0.0
  %1339 = vmatpush1.msra.mxu0 %v1306
  %1340 = vmatprep.subr.mxu0 0.0
  %1341 = vmatpush2.msra.mxu0 0.0
  %1342 = vmatprep.subr.mxu0 0.0
  %1343 = vmatpush2.msra.mxu0 0.0
  %1344 = vmatprep.subr.mxu0 0.0
  %1345 = vmatpush2.msra.mxu0 0.0
  %1346 = vmatprep.subr.mxu0 0.0
  %1347 = vmatpush2.msra.mxu0 0.0
  %1348 = vmatprep.subr.mxu0 0.0
  %1349 = vmatpush2.msra.mxu0 0.0
  %1350 = vmatprep.subr.mxu0 0.0
  %1351 = vmatpush2.msra.mxu0 0.0
  %1352 = vmatprep.subr.mxu0 0.0
  %1353 = vmatpush2.msra.mxu0 0.0
  %1354 = vmatprep.subr.mxu0 0.0
  %1355 = vmatpush2.msra.mxu0 0.0
  %1356 = vmatprep.subr.mxu0 0.0
  %1357 = vmatpush2.msra.mxu0 0.0
  %1358 = vmatprep.subr.mxu0 0.0
  %1359 = vmatpush2.msra.mxu0 0.0
  %1360 = vmatprep.subr.mxu0 0.0
  %1361 = vmatpush2.msra.mxu0 0.0
  %1362 = vmatprep.subr.mxu0 0.0
  %1363 = vmatpush2.msra.mxu0 0.0
  %1364 = vmatprep.subr.mxu0 0.0
  %1365 = vmatpush2.msra.mxu0 0.0
  %1366 = vmatprep.subr.mxu0 0.0
  %1367 = vmatpush2.msra.mxu0 0.0
  %1368 = vmatprep.subr.mxu0 0.0
  %1369 = vmatpush2.msra.mxu0 0.0
  %1370 = vmatprep.subr.mxu0 0.0
  %1371 = vmatpush2.msra.mxu0 0.0
  %1372 = vmatprep.mubr.f32.mxu0 0.0
  %1373 = vmatmul.mubr.f32.gmra.mxu0 %v62
  %v1374 = vpop.f32.mrf.mxu0
  %v1375 = vadd.f32 0.0, %v1374
  %v1376 = vpop.f32.mrf.mxu0
  %1377 = vdwg.mxu0
  %vm1378 = vmand %vm52, %vm1224
  %vm1379 = vmand %vm53, %vm1225
  %v1380 = vsel %vm1378, 1, 0
  %v1381 = vsel %vm1379, 1, 0
  %v1382 = vcvt.s32.f32 %v1380
  %v1383 = vcvt.s32.f32 %v1381
  %1384 = vmatprep.subr.mxu0 0.0
  %1385 = vmatpush1.msra.mxu0 0.0
  %1386 = vmatprep.subr.mxu0 0.0
  %1387 = vmatpush1.msra.mxu0 0.0
  %1388 = vmatprep.subr.mxu0 0.0
  %1389 = vmatpush1.msra.mxu0 0.0
  %1390 = vmatprep.subr.mxu0 0.0
  %1391 = vmatpush1.msra.mxu0 0.0
  %1392 = vmatprep.subr.mxu0 0.0
  %1393 = vmatpush1.msra.mxu0 0.0
  %1394 = vmatprep.subr.mxu0 0.0
  %1395 = vmatpush1.msra.mxu0 0.0
  %1396 = vmatprep.subr.mxu0 0.0
  %1397 = vmatpush1.msra.mxu0 0.0
  %1398 = vmatprep.subr.mxu0 0.0
  %1399 = vmatpush1.msra.mxu0 0.0
  %1400 = vmatprep.subr.mxu0 0.0
  %1401 = vmatpush1.msra.mxu0 0.0
  %1402 = vmatprep.subr.mxu0 0.0
  %1403 = vmatpush1.msra.mxu0 0.0
  %1404 = vmatprep.subr.mxu0 0.0
  %1405 = vmatpush1.msra.mxu0 0.0
  %1406 = vmatprep.subr.mxu0 0.0
  %1407 = vmatpush1.msra.mxu0 0.0
  %1408 = vmatprep.subr.mxu0 0.0
  %1409 = vmatpush1.msra.mxu0 0.0
  %1410 = vmatprep.subr.mxu0 0.0
  %1411 = vmatpush1.msra.mxu0 0.0
  %1412 = vmatprep.subr.mxu0 0.0
  %1413 = vmatpush1.msra.mxu0 %v1383
  %1414 = vmatprep.subr.mxu0 0.0
  %1415 = vmatpush1.msra.mxu0 %v1382
  %1416 = vmatprep.subr.mxu0 0.0
  %1417 = vmatpush2.msra.mxu0 0.0
  %1418 = vmatprep.subr.mxu0 0.0
  %1419 = vmatpush2.msra.mxu0 0.0
  %1420 = vmatprep.subr.mxu0 0.0
  %1421 = vmatpush2.msra.mxu0 0.0
  %1422 = vmatprep.subr.mxu0 0.0
  %1423 = vmatpush2.msra.mxu0 0.0
  %1424 = vmatprep.subr.mxu0 0.0
  %1425 = vmatpush2.msra.mxu0 0.0
  %1426 = vmatprep.subr.mxu0 0.0
  %1427 = vmatpush2.msra.mxu0 0.0
  %1428 = vmatprep.subr.mxu0 0.0
  %1429 = vmatpush2.msra.mxu0 0.0
  %1430 = vmatprep.subr.mxu0 0.0
  %1431 = vmatpush2.msra.mxu0 0.0
  %1432 = vmatprep.subr.mxu0 0.0
  %1433 = vmatpush2.msra.mxu0 0.0
  %1434 = vmatprep.subr.mxu0 0.0
  %1435 = vmatpush2.msra.mxu0 0.0
  %1436 = vmatprep.subr.mxu0 0.0
  %1437 = vmatpush2.msra.mxu0 0.0
  %1438 = vmatprep.subr.mxu0 0.0
  %1439 = vmatpush2.msra.mxu0 0.0
  %1440 = vmatprep.subr.mxu0 0.0
  %1441 = vmatpush2.msra.mxu0 0.0
  %1442 = vmatprep.subr.mxu0 0.0
  %1443 = vmatpush2.msra.mxu0 0.0
  %1444 = vmatprep.subr.mxu0 0.0
  %1445 = vmatpush2.msra.mxu0 0.0
  %1446 = vmatprep.subr.mxu0 0.0
  %1447 = vmatpush2.msra.mxu0 0.0
  %1448 = vmatprep.mubr.f32.mxu0 0.0
  %1449 = vmatmul.mubr.f32.gmra.mxu0 %v62
  %v1450 = vpop.f32.mrf.mxu0
  %v1451 = vadd.f32 0.0, %v1450
  %v1452 = vpop.f32.mrf.mxu0
  %1453 = vdwg.mxu0
  %vm1454 = vmand %vm54, %vm1224
  %vm1455 = vmand %vm55, %vm1225
  %v1456 = vsel %vm1454, 1, 0
  %v1457 = vsel %vm1455, 1, 0
  %v1458 = vcvt.s32.f32 %v1456
  %v1459 = vcvt.s32.f32 %v1457
  %1460 = vmatprep.subr.mxu0 0.0
  %1461 = vmatpush1.msra.mxu0 0.0
  %1462 = vmatprep.subr.mxu0 0.0
  %1463 = vmatpush1.msra.mxu0 0.0
  %1464 = vmatprep.subr.mxu0 0.0
  %1465 = vmatpush1.msra.mxu0 0.0
  %1466 = vmatprep.subr.mxu0 0.0
  %1467 = vmatpush1.msra.mxu0 0.0
  %1468 = vmatprep.subr.mxu0 0.0
  %1469 = vmatpush1.msra.mxu0 0.0
  %1470 = vmatprep.subr.mxu0 0.0
  %1471 = vmatpush1.msra.mxu0 0.0
  %1472 = vmatprep.subr.mxu0 0.0
  %1473 = vmatpush1.msra.mxu0 0.0
  %1474 = vmatprep.subr.mxu0 0.0
  %1475 = vmatpush1.msra.mxu0 0.0
  %1476 = vmatprep.subr.mxu0 0.0
  %1477 = vmatpush1.msra.mxu0 0.0
  %1478 = vmatprep.subr.mxu0 0.0
  %1479 = vmatpush1.msra.mxu0 0.0
  %1480 = vmatprep.subr.mxu0 0.0
  %1481 = vmatpush1.msra.mxu0 0.0
  %1482 = vmatprep.subr.mxu0 0.0
  %1483 = vmatpush1.msra.mxu0 0.0
  %1484 = vmatprep.subr.mxu0 0.0
  %1485 = vmatpush1.msra.mxu0 0.0
  %1486 = vmatprep.subr.mxu0 0.0
  %1487 = vmatpush1.msra.mxu0 0.0
  %1488 = vmatprep.subr.mxu0 0.0
  %1489 = vmatpush1.msra.mxu0 %v1459
  %1490 = vmatprep.subr.mxu0 0.0
  %1491 = vmatpush1.msra.mxu0 %v1458
  %1492 = vmatprep.subr.mxu0 0.0
  %1493 = vmatpush2.msra.mxu0 0.0
  %1494 = vmatprep.subr.mxu0 0.0
  %1495 = vmatpush2.msra.mxu0 0.0
  %1496 = vmatprep.subr.mxu0 0.0
  %1497 = vmatpush2.msra.mxu0 0.0
  %1498 = vmatprep.subr.mxu0 0.0
  %1499 = vmatpush2.msra.mxu0 0.0
  %1500 = vmatprep.subr.mxu0 0.0
  %1501 = vmatpush2.msra.mxu0 0.0
  %1502 = vmatprep.subr.mxu0 0.0
  %1503 = vmatpush2.msra.mxu0 0.0
  %1504 = vmatprep.subr.mxu0 0.0
  %1505 = vmatpush2.msra.mxu0 0.0
  %1506 = vmatprep.subr.mxu0 0.0
  %1507 = vmatpush2.msra.mxu0 0.0
  %1508 = vmatprep.subr.mxu0 0.0
  %1509 = vmatpush2.msra.mxu0 0.0
  %1510 = vmatprep.subr.mxu0 0.0
  %1511 = vmatpush2.msra.mxu0 0.0
  %1512 = vmatprep.subr.mxu0 0.0
  %1513 = vmatpush2.msra.mxu0 0.0
  %1514 = vmatprep.subr.mxu0 0.0
  %1515 = vmatpush2.msra.mxu0 0.0
  %1516 = vmatprep.subr.mxu0 0.0
  %1517 = vmatpush2.msra.mxu0 0.0
  %1518 = vmatprep.subr.mxu0 0.0
  %1519 = vmatpush2.msra.mxu0 0.0
  %1520 = vmatprep.subr.mxu0 0.0
  %1521 = vmatpush2.msra.mxu0 0.0
  %1522 = vmatprep.subr.mxu0 0.0
  %1523 = vmatpush2.msra.mxu0 0.0
  %1524 = vmatprep.mubr.f32.mxu0 0.0
  %1525 = vmatmul.mubr.f32.gmra.mxu0 %v62
  %v1526 = vpop.f32.mrf.mxu0
  %v1527 = vadd.f32 0.0, %v1526
  %v1528 = vpop.f32.mrf.mxu0
  %1529 = vdwg.mxu0
  %v1530 = vadd.f32 %v1375, %v1451
  %v1531 = vadd.f32 %v1299, %v1527
  %1532 = vset.pattern.permute.xlu0 1
  %1533 = vperm.xlu0 %1532, %v26
  %v1534 = vpop.permute.xlu0 %1533
  %1536 = vset.pattern.permute.xlu0 1
  %1537 = vperm.xlu0 %1536, %v27
  %v1538 = vpop.permute.xlu0 %1537
  %v1541 = vlaneseq
  %v1542 = vshrl.u32 %v1541, 7
  %v1543 = vsub.s32 0, %v1542
  %v1544 = vrot.slane %v25, %v1543
  %vm1546 = vcmp.eq.f32.partialorder %v1534, %v1544
  %vm1547 = vcmp.eq.f32.partialorder %v1538, %v1544
  %vm1548 = vmand %vm38, %vm1546
  %vm1549 = vmand %vm39, %vm1547
  %v1550 = vsel %vm1548, 1, 0
  %v1551 = vsel %vm1549, 1, 0
  %v1552 = vcvt.s32.f32 %v1550
  %v1553 = vcvt.s32.f32 %v1551
  %1554 = vmatprep.subr.mxu0 0.0
  %1555 = vmatpush1.msra.mxu0 0.0
  %1556 = vmatprep.subr.mxu0 0.0
  %1557 = vmatpush1.msra.mxu0 0.0
  %1558 = vmatprep.subr.mxu0 0.0
  %1559 = vmatpush1.msra.mxu0 0.0
  %1560 = vmatprep.subr.mxu0 0.0
  %1561 = vmatpush1.msra.mxu0 0.0
  %1562 = vmatprep.subr.mxu0 0.0
  %1563 = vmatpush1.msra.mxu0 0.0
  %1564 = vmatprep.subr.mxu0 0.0
  %1565 = vmatpush1.msra.mxu0 0.0
  %1566 = vmatprep.subr.mxu0 0.0
  %1567 = vmatpush1.msra.mxu0 0.0
  %1568 = vmatprep.subr.mxu0 0.0
  %1569 = vmatpush1.msra.mxu0 0.0
  %1570 = vmatprep.subr.mxu0 0.0
  %1571 = vmatpush1.msra.mxu0 0.0
  %1572 = vmatprep.subr.mxu0 0.0
  %1573 = vmatpush1.msra.mxu0 0.0
  %1574 = vmatprep.subr.mxu0 0.0
  %1575 = vmatpush1.msra.mxu0 0.0
  %1576 = vmatprep.subr.mxu0 0.0
  %1577 = vmatpush1.msra.mxu0 0.0
  %1578 = vmatprep.subr.mxu0 0.0
  %1579 = vmatpush1.msra.mxu0 0.0
  %1580 = vmatprep.subr.mxu0 0.0
  %1581 = vmatpush1.msra.mxu0 0.0
  %1582 = vmatprep.subr.mxu0 0.0
  %1583 = vmatpush1.msra.mxu0 %v1553
  %1584 = vmatprep.subr.mxu0 0.0
  %1585 = vmatpush1.msra.mxu0 %v1552
  %1586 = vmatprep.subr.mxu0 0.0
  %1587 = vmatpush2.msra.mxu0 0.0
  %1588 = vmatprep.subr.mxu0 0.0
  %1589 = vmatpush2.msra.mxu0 0.0
  %1590 = vmatprep.subr.mxu0 0.0
  %1591 = vmatpush2.msra.mxu0 0.0
  %1592 = vmatprep.subr.mxu0 0.0
  %1593 = vmatpush2.msra.mxu0 0.0
  %1594 = vmatprep.subr.mxu0 0.0
  %1595 = vmatpush2.msra.mxu0 0.0
  %1596 = vmatprep.subr.mxu0 0.0
  %1597 = vmatpush2.msra.mxu0 0.0
  %1598 = vmatprep.subr.mxu0 0.0
  %1599 = vmatpush2.msra.mxu0 0.0
  %1600 = vmatprep.subr.mxu0 0.0
  %1601 = vmatpush2.msra.mxu0 0.0
  %1602 = vmatprep.subr.mxu0 0.0
  %1603 = vmatpush2.msra.mxu0 0.0
  %1604 = vmatprep.subr.mxu0 0.0
  %1605 = vmatpush2.msra.mxu0 0.0
  %1606 = vmatprep.subr.mxu0 0.0
  %1607 = vmatpush2.msra.mxu0 0.0
  %1608 = vmatprep.subr.mxu0 0.0
  %1609 = vmatpush2.msra.mxu0 0.0
  %1610 = vmatprep.subr.mxu0 0.0
  %1611 = vmatpush2.msra.mxu0 0.0
  %1612 = vmatprep.subr.mxu0 0.0
  %1613 = vmatpush2.msra.mxu0 0.0
  %1614 = vmatprep.subr.mxu0 0.0
  %1615 = vmatpush2.msra.mxu0 0.0
  %1616 = vmatprep.subr.mxu0 0.0
  %1617 = vmatpush2.msra.mxu0 0.0
  %1618 = vmatprep.mubr.f32.mxu0 0.0
  %1619 = vmatmul.mubr.f32.gmra.mxu0 %v62
  %v1620 = vpop.f32.mrf.mxu0
  %v1621 = vadd.f32 0.0, %v1620
  %v1622 = vpop.f32.mrf.mxu0
  %1623 = vdwg.mxu0
  %vm1624 = vmand %vm50, %vm1546
  %vm1625 = vmand %vm51, %vm1547
  %v1626 = vsel %vm1624, 1, 0
  %v1627 = vsel %vm1625, 1, 0
  %v1628 = vcvt.s32.f32 %v1626
  %v1629 = vcvt.s32.f32 %v1627
  %1630 = vmatprep.subr.mxu0 0.0
  %1631 = vmatpush1.msra.mxu0 0.0
  %1632 = vmatprep.subr.mxu0 0.0
  %1633 = vmatpush1.msra.mxu0 0.0
  %1634 = vmatprep.subr.mxu0 0.0
  %1635 = vmatpush1.msra.mxu0 0.0
  %1636 = vmatprep.subr.mxu0 0.0
  %1637 = vmatpush1.msra.mxu0 0.0
  %1638 = vmatprep.subr.mxu0 0.0
  %1639 = vmatpush1.msra.mxu0 0.0
  %1640 = vmatprep.subr.mxu0 0.0
  %1641 = vmatpush1.msra.mxu0 0.0
  %1642 = vmatprep.subr.mxu0 0.0
  %1643 = vmatpush1.msra.mxu0 0.0
  %1644 = vmatprep.subr.mxu0 0.0
  %1645 = vmatpush1.msra.mxu0 0.0
  %1646 = vmatprep.subr.mxu0 0.0
  %1647 = vmatpush1.msra.mxu0 0.0
  %1648 = vmatprep.subr.mxu0 0.0
  %1649 = vmatpush1.msra.mxu0 0.0
  %1650 = vmatprep.subr.mxu0 0.0
  %1651 = vmatpush1.msra.mxu0 0.0
  %1652 = vmatprep.subr.mxu0 0.0
  %1653 = vmatpush1.msra.mxu0 0.0
  %1654 = vmatprep.subr.mxu0 0.0
  %1655 = vmatpush1.msra.mxu0 0.0
  %1656 = vmatprep.subr.mxu0 0.0
  %1657 = vmatpush1.msra.mxu0 0.0
  %1658 = vmatprep.subr.mxu0 0.0
  %1659 = vmatpush1.msra.mxu0 %v1629
  %1660 = vmatprep.subr.mxu0 0.0
  %1661 = vmatpush1.msra.mxu0 %v1628
  %1662 = vmatprep.subr.mxu0 0.0
  %1663 = vmatpush2.msra.mxu0 0.0
  %1664 = vmatprep.subr.mxu0 0.0
  %1665 = vmatpush2.msra.mxu0 0.0
  %1666 = vmatprep.subr.mxu0 0.0
  %1667 = vmatpush2.msra.mxu0 0.0
  %1668 = vmatprep.subr.mxu0 0.0
  %1669 = vmatpush2.msra.mxu0 0.0
  %1670 = vmatprep.subr.mxu0 0.0
  %1671 = vmatpush2.msra.mxu0 0.0
  %1672 = vmatprep.subr.mxu0 0.0
  %1673 = vmatpush2.msra.mxu0 0.0
  %1674 = vmatprep.subr.mxu0 0.0
  %1675 = vmatpush2.msra.mxu0 0.0
  %1676 = vmatprep.subr.mxu0 0.0
  %1677 = vmatpush2.msra.mxu0 0.0
  %1678 = vmatprep.subr.mxu0 0.0
  %1679 = vmatpush2.msra.mxu0 0.0
  %1680 = vmatprep.subr.mxu0 0.0
  %1681 = vmatpush2.msra.mxu0 0.0
  %1682 = vmatprep.subr.mxu0 0.0
  %1683 = vmatpush2.msra.mxu0 0.0
  %1684 = vmatprep.subr.mxu0 0.0
  %1685 = vmatpush2.msra.mxu0 0.0
  %1686 = vmatprep.subr.mxu0 0.0
  %1687 = vmatpush2.msra.mxu0 0.0
  %1688 = vmatprep.subr.mxu0 0.0
  %1689 = vmatpush2.msra.mxu0 0.0
  %1690 = vmatprep.subr.mxu0 0.0
  %1691 = vmatpush2.msra.mxu0 0.0
  %1692 = vmatprep.subr.mxu0 0.0
  %1693 = vmatpush2.msra.mxu0 0.0
  %1694 = vmatprep.mubr.f32.mxu0 0.0
  %1695 = vmatmul.mubr.f32.gmra.mxu0 %v62
  %v1696 = vpop.f32.mrf.mxu0
  %v1697 = vadd.f32 0.0, %v1696
  %v1698 = vpop.f32.mrf.mxu0
  %1699 = vdwg.mxu0
  %vm1700 = vmand %vm52, %vm1546
  %vm1701 = vmand %vm53, %vm1547
  %v1702 = vsel %vm1700, 1, 0
  %v1703 = vsel %vm1701, 1, 0
  %v1704 = vcvt.s32.f32 %v1702
  %v1705 = vcvt.s32.f32 %v1703
  %1706 = vmatprep.subr.mxu0 0.0
  %1707 = vmatpush1.msra.mxu0 0.0
  %1708 = vmatprep.subr.mxu0 0.0
  %1709 = vmatpush1.msra.mxu0 0.0
  %1710 = vmatprep.subr.mxu0 0.0
  %1711 = vmatpush1.msra.mxu0 0.0
  %1712 = vmatprep.subr.mxu0 0.0
  %1713 = vmatpush1.msra.mxu0 0.0
  %1714 = vmatprep.subr.mxu0 0.0
  %1715 = vmatpush1.msra.mxu0 0.0
  %1716 = vmatprep.subr.mxu0 0.0
  %1717 = vmatpush1.msra.mxu0 0.0
  %1718 = vmatprep.subr.mxu0 0.0
  %1719 = vmatpush1.msra.mxu0 0.0
  %1720 = vmatprep.subr.mxu0 0.0
  %1721 = vmatpush1.msra.mxu0 0.0
  %1722 = vmatprep.subr.mxu0 0.0
  %1723 = vmatpush1.msra.mxu0 0.0
  %1724 = vmatprep.subr.mxu0 0.0
  %1725 = vmatpush1.msra.mxu0 0.0
  %1726 = vmatprep.subr.mxu0 0.0
  %1727 = vmatpush1.msra.mxu0 0.0
  %1728 = vmatprep.subr.mxu0 0.0
  %1729 = vmatpush1.msra.mxu0 0.0
  %1730 = vmatprep.subr.mxu0 0.0
  %1731 = vmatpush1.msra.mxu0 0.0
  %1732 = vmatprep.subr.mxu0 0.0
  %1733 = vmatpush1.msra.mxu0 0.0
  %1734 = vmatprep.subr.mxu0 0.0
  %1735 = vmatpush1.msra.mxu0 %v1705
  %1736 = vmatprep.subr.mxu0 0.0
  %1737 = vmatpush1.msra.mxu0 %v1704
  %1738 = vmatprep.subr.mxu0 0.0
  %1739 = vmatpush2.msra.mxu0 0.0
  %1740 = vmatprep.subr.mxu0 0.0
  %1741 = vmatpush2.msra.mxu0 0.0
  %1742 = vmatprep.subr.mxu0 0.0
  %1743 = vmatpush2.msra.mxu0 0.0
  %1744 = vmatprep.subr.mxu0 0.0
  %1745 = vmatpush2.msra.mxu0 0.0
  %1746 = vmatprep.subr.mxu0 0.0
  %1747 = vmatpush2.msra.mxu0 0.0
  %1748 = vmatprep.subr.mxu0 0.0
  %1749 = vmatpush2.msra.mxu0 0.0
  %1750 = vmatprep.subr.mxu0 0.0
  %1751 = vmatpush2.msra.mxu0 0.0
  %1752 = vmatprep.subr.mxu0 0.0
  %1753 = vmatpush2.msra.mxu0 0.0
  %1754 = vmatprep.subr.mxu0 0.0
  %1755 = vmatpush2.msra.mxu0 0.0
  %1756 = vmatprep.subr.mxu0 0.0
  %1757 = vmatpush2.msra.mxu0 0.0
  %1758 = vmatprep.subr.mxu0 0.0
  %1759 = vmatpush2.msra.mxu0 0.0
  %1760 = vmatprep.subr.mxu0 0.0
  %1761 = vmatpush2.msra.mxu0 0.0
  %1762 = vmatprep.subr.mxu0 0.0
  %1763 = vmatpush2.msra.mxu0 0.0
  %1764 = vmatprep.subr.mxu0 0.0
  %1765 = vmatpush2.msra.mxu0 0.0
  %1766 = vmatprep.subr.mxu0 0.0
  %1767 = vmatpush2.msra.mxu0 0.0
  %1768 = vmatprep.subr.mxu0 0.0
  %1769 = vmatpush2.msra.mxu0 0.0
  %1770 = vmatprep.mubr.f32.mxu0 0.0
  %1771 = vmatmul.mubr.f32.gmra.mxu0 %v62
  %v1772 = vpop.f32.mrf.mxu0
  %v1773 = vadd.f32 0.0, %v1772
  %v1774 = vpop.f32.mrf.mxu0
  %1775 = vdwg.mxu0
  %vm1776 = vmand %vm54, %vm1546
  %vm1777 = vmand %vm55, %vm1547
  %v1778 = vsel %vm1776, 1, 0
  %v1779 = vsel %vm1777, 1, 0
  %v1780 = vcvt.s32.f32 %v1778
  %v1781 = vcvt.s32.f32 %v1779
  %1782 = vmatprep.subr.mxu0 0.0
  %1783 = vmatpush1.msra.mxu0 0.0
  %1784 = vmatprep.subr.mxu0 0.0
  %1785 = vmatpush1.msra.mxu0 0.0
  %1786 = vmatprep.subr.mxu0 0.0
  %1787 = vmatpush1.msra.mxu0 0.0
  %1788 = vmatprep.subr.mxu0 0.0
  %1789 = vmatpush1.msra.mxu0 0.0
  %1790 = vmatprep.subr.mxu0 0.0
  %1791 = vmatpush1.msra.mxu0 0.0
  %1792 = vmatprep.subr.mxu0 0.0
  %1793 = vmatpush1.msra.mxu0 0.0
  %1794 = vmatprep.subr.mxu0 0.0
  %1795 = vmatpush1.msra.mxu0 0.0
  %1796 = vmatprep.subr.mxu0 0.0
  %1797 = vmatpush1.msra.mxu0 0.0
  %1798 = vmatprep.subr.mxu0 0.0
  %1799 = vmatpush1.msra.mxu0 0.0
  %1800 = vmatprep.subr.mxu0 0.0
  %1801 = vmatpush1.msra.mxu0 0.0
  %1802 = vmatprep.subr.mxu0 0.0
  %1803 = vmatpush1.msra.mxu0 0.0
  %1804 = vmatprep.subr.mxu0 0.0
  %1805 = vmatpush1.msra.mxu0 0.0
  %1806 = vmatprep.subr.mxu0 0.0
  %1807 = vmatpush1.msra.mxu0 0.0
  %1808 = vmatprep.subr.mxu0 0.0
  %1809 = vmatpush1.msra.mxu0 0.0
  %1810 = vmatprep.subr.mxu0 0.0
  %1811 = vmatpush1.msra.mxu0 %v1781
  %1812 = vmatprep.subr.mxu0 0.0
  %1813 = vmatpush1.msra.mxu0 %v1780
  %1814 = vmatprep.subr.mxu0 0.0
  %1815 = vmatpush2.msra.mxu0 0.0
  %1816 = vmatprep.subr.mxu0 0.0
  %1817 = vmatpush2.msra.mxu0 0.0
  %1818 = vmatprep.subr.mxu0 0.0
  %1819 = vmatpush2.msra.mxu0 0.0
  %1820 = vmatprep.subr.mxu0 0.0
  %1821 = vmatpush2.msra.mxu0 0.0
  %1822 = vmatprep.subr.mxu0 0.0
  %1823 = vmatpush2.msra.mxu0 0.0
  %1824 = vmatprep.subr.mxu0 0.0
  %1825 = vmatpush2.msra.mxu0 0.0
  %1826 = vmatprep.subr.mxu0 0.0
  %1827 = vmatpush2.msra.mxu0 0.0
  %1828 = vmatprep.subr.mxu0 0.0
  %1829 = vmatpush2.msra.mxu0 0.0
  %1830 = vmatprep.subr.mxu0 0.0
  %1831 = vmatpush2.msra.mxu0 0.0
  %1832 = vmatprep.subr.mxu0 0.0
  %1833 = vmatpush2.msra.mxu0 0.0
  %1834 = vmatprep.subr.mxu0 0.0
  %1835 = vmatpush2.msra.mxu0 0.0
  %1836 = vmatprep.subr.mxu0 0.0
  %1837 = vmatpush2.msra.mxu0 0.0
  %1838 = vmatprep.subr.mxu0 0.0
  %1839 = vmatpush2.msra.mxu0 0.0
  %1840 = vmatprep.subr.mxu0 0.0
  %1841 = vmatpush2.msra.mxu0 0.0
  %1842 = vmatprep.subr.mxu0 0.0
  %1843 = vmatpush2.msra.mxu0 0.0
  %1844 = vmatprep.subr.mxu0 0.0
  %1845 = vmatpush2.msra.mxu0 0.0
  %1846 = vmatprep.mubr.f32.mxu0 0.0
  %1847 = vmatmul.mubr.f32.gmra.mxu0 %v62
  %v1848 = vpop.f32.mrf.mxu0
  %v1849 = vadd.f32 0.0, %v1848
  %v1850 = vpop.f32.mrf.mxu0
  %1851 = vdwg.mxu0
  %v1852 = vadd.f32 %v1697, %v1773
  %v1853 = vadd.f32 %v1621, %v1849
  %v1854 = vmul.f32 %v205, %v205
  %v1855 = vrcp.pop %v131
  %v1856 = vmul.f32 1.0, %v1855
  %v1857 = vsub.f32 0.0, %v1856
  %v1858 = vlog2.pop %v773
  %v1859 = vmul.f32 %v1858, 0.6931472
  %v1860 = vlog2.pop %v131
  %v1861 = vmul.f32 %v1860, 0.6931472
  %v1862 = vsub.f32 %v1859, %v1861
  %v1863 = vmul.f32 %v1857, %v1862
  %v1864 = vmul.f32 %v1863, 1.442695
  %v1865 = vmul.f32 %v681, %v681
  %v1866 = vrcp.pop %v599
  %v1867 = vmul.f32 1.0, %v1866
  %v1868 = vsub.f32 0.0, %v1867
  %v1869 = vlog2.pop %v1205
  %v1870 = vmul.f32 %v1869, 0.6931472
  %v1871 = vlog2.pop %v599
  %v1872 = vmul.f32 %v1871, 0.6931472
  %v1873 = vsub.f32 %v1870, %v1872
  %v1874 = vmul.f32 %v1868, %v1873
  %v1875 = vmul.f32 %v1874, 1.442695
  %v1876 = vmul.f32 %v24, %v24
  %v1877 = vlog2.pop %v1299
  %v1878 = vmul.f32 %v1877, 0.6931472
  %v1879 = vsub.f32 %v1878, %v1861
  %v1880 = vmul.f32 %v1857, %v1879
  %v1881 = vmul.f32 %v1880, 1.442695
  %v1882 = vlog2.pop %v1531
  %v1883 = vmul.f32 %v1882, 0.6931472
  %v1884 = vsub.f32 %v1883, %v1872
  %v1885 = vmul.f32 %v1868, %v1884
  %v1886 = vmul.f32 %v1885, 1.442695
  %v1887 = vmul.f32 %v25, %v25
  %v1888 = vlog2.pop %v1621
  %v1889 = vmul.f32 %v1888, 0.6931472
  %v1890 = vsub.f32 %v1889, %v1861
  %v1891 = vmul.f32 %v1857, %v1890
  %v1892 = vmul.f32 %v1891, 1.442695
  %v1893 = vlog2.pop %v1853
  %v1894 = vmul.f32 %v1893, 0.6931472
  %v1895 = vsub.f32 %v1894, %v1872
  %v1896 = vmul.f32 %v1868, %v1895
  %v1897 = vmul.f32 %v1896, 1.442695
  %v1898 = vmul.f32 %v353, %v353
  %v1899 = vrcp.pop %v279
  %v1900 = vmul.f32 1.0, %v1899
  %v1901 = vsub.f32 0.0, %v1900
  %v1902 = vlog2.pop %v865
  %v1903 = vmul.f32 %v1902, 0.6931472
  %v1904 = vlog2.pop %v279
  %v1905 = vmul.f32 %v1904, 0.6931472
  %v1906 = vsub.f32 %v1903, %v1905
  %v1907 = vmul.f32 %v1901, %v1906
  %v1908 = vmul.f32 %v1907, 1.442695
  %v1909 = vmul.f32 %v599, %v599
  %v1910 = vrcp.pop %v681
  %v1911 = vmul.f32 1.0, %v1910
  %v1912 = vsub.f32 0.0, %v1911
  %v1913 = vlog2.pop %v1045
  %v1914 = vmul.f32 %v1913, 0.6931472
  %v1915 = vlog2.pop %v681
  %v1916 = vmul.f32 %v1915, 0.6931472
  %v1917 = vsub.f32 %v1914, %v1916
  %v1918 = vmul.f32 %v1912, %v1917
  %v1919 = vmul.f32 %v1918, 1.442695
  %v1920 = vlog2.pop %v1375
  %v1921 = vmul.f32 %v1920, 0.6931472
  %v1922 = vsub.f32 %v1921, %v1905
  %v1923 = vmul.f32 %v1901, %v1922
  %v1924 = vmul.f32 %v1923, 1.442695
  %v1925 = vlog2.pop %v1530
  %v1926 = vmul.f32 %v1925, 0.6931472
  %v1927 = vsub.f32 %v1926, %v1916
  %v1928 = vmul.f32 %v1912, %v1927
  %v1929 = vmul.f32 %v1928, 1.442695
  %v1930 = vlog2.pop %v1697
  %v1931 = vmul.f32 %v1930, 0.6931472
  %v1932 = vsub.f32 %v1931, %v1905
  %v1933 = vmul.f32 %v1901, %v1932
  %v1934 = vmul.f32 %v1933, 1.442695
  %v1935 = vlog2.pop %v1852
  %v1936 = vmul.f32 %v1935, 0.6931472
  %v1937 = vsub.f32 %v1936, %v1916
  %v1938 = vmul.f32 %v1912, %v1937
  %v1939 = vmul.f32 %v1938, 1.442695
  %vm1940 = vcmask 122880
  %1941 = vst.msk [vmem:[%s5] sm:$0x1] %vm1940, 1.0
  %1942 = vst.msk [vmem:[%s5 + $0x1] sm:$0x1] %vm1940, %v205
  %1943 = vst.msk [vmem:[%s5 + $0x2] sm:$0x1] %vm1940, %v1854
  %1944 = vst.msk [vmem:[%s5 + $0x3] sm:$0x1] %vm1940, %v1864
  %1945 = vst.msk [vmem:[%s5 + $0x4] sm:$0x1] %vm1940, %v681
  %1946 = vst.msk [vmem:[%s5 + $0x5] sm:$0x1] %vm1940, %v1865
  %1947 = vst.msk [vmem:[%s5 + $0x6] sm:$0x1] %vm1940, %v1875
  %1948 = vst.msk [vmem:[%s5 + $0x7] sm:$0x1] %vm1940, %v24
  %1949 = vst.msk [vmem:[%s5 + $0x8] sm:$0x1] %vm1940, %v1876
  %1950 = vst.msk [vmem:[%s5 + $0x9] sm:$0x1] %vm1940, %v1881
  %1951 = vst.msk [vmem:[%s5 + $0xa] sm:$0x1] %vm1940, %v1886
  %1952 = vst.msk [vmem:[%s5 + $0xb] sm:$0x1] %vm1940, %v25
  %1953 = vst.msk [vmem:[%s5 + $0xc] sm:$0x1] %vm1940, %v1887
  %1954 = vst.msk [vmem:[%s5 + $0xd] sm:$0x1] %vm1940, %v1892
  %1955 = vst.msk [vmem:[%s5 + $0xe] sm:$0x1] %vm1940, %v1897
  %1956 = vst.msk [vmem:[%s5 + $0xf] sm:$0x1] %vm1940, 1.0
  %1957 = vst.msk [vmem:[%s5 + $0x10] sm:$0x1] %vm1940, %v353
  %1958 = vst.msk [vmem:[%s5 + $0x11] sm:$0x1] %vm1940, %v1898
  %1959 = vst.msk [vmem:[%s5 + $0x12] sm:$0x1] %vm1940, %v1908
  %1960 = vst.msk [vmem:[%s5 + $0x13] sm:$0x1] %vm1940, %v599
  %1961 = vst.msk [vmem:[%s5 + $0x14] sm:$0x1] %vm1940, %v1909
  %1962 = vst.msk [vmem:[%s5 + $0x15] sm:$0x1] %vm1940, %v1919
  %1963 = vst.msk [vmem:[%s5 + $0x16] sm:$0x1] %vm1940, %v24
  %1964 = vst.msk [vmem:[%s5 + $0x17] sm:$0x1] %vm1940, %v1876
  %1965 = vst.msk [vmem:[%s5 + $0x18] sm:$0x1] %vm1940, %v1924
  %1966 = vst.msk [vmem:[%s5 + $0x19] sm:$0x1] %vm1940, %v1929
  %1967 = vst.msk [vmem:[%s5 + $0x1a] sm:$0x1] %vm1940, %v25
  %1968 = vst.msk [vmem:[%s5 + $0x1b] sm:$0x1] %vm1940, %v1887
  %1969 = vst.msk [vmem:[%s5 + $0x1c] sm:$0x1] %vm1940, %v1934
  %1970 = vst.msk [vmem:[%s5 + $0x1d] sm:$0x1] %vm1940, %v1939
  // Predicated region
  $region22: #{tpu_custom_call.1} parent=0 // pred_check
    _
  $region23: #{tpu_custom_call.1} parent=0 // pred_check_branch
    %1972 = sbr.rel (0) target = $region25
  $region24: #{tpu_custom_call.1} parent=0 // pred_region
    _
  $region25: #{tpu_custom_call.1} parent=0 // pred_fallthru
    _
  // Predicated region
  $region26: #{tpu_custom_call.1} parent=0 // pred_check
    _
  $region27: #{tpu_custom_call.1} parent=0 // pred_check_branch
    %1974 = sbr.rel (0) target = $region29
  $region28: #{tpu_custom_call.1} parent=0 // pred_region
    _
  $region29: #{tpu_custom_call.1} parent=0 // pred_fallthru
    _

</llo_original>
